<compile_context>
chip_gen: v7x
topology: tpu7x:2x2x1
jax: 0.10.0
libtpu: 0.0.40
codegen_flags: <defaults>
</compile_context>

<pallas_src>
import functools

import jax
import jax.numpy as jnp
from jax.experimental import pallas as pl
from jax.experimental.pallas import tpu as pltpu

EPS = 1e-5
LANE = 128
W_OFF = 8          # sublane-aligned start of the y1p interior window


def _round_up(v, m):
    return ((v + m - 1) // m) * m


# ------------------------------ Pallas kernel ------------------------------ #

def _fused_block_kernel(*refs, ho, wo, k1, has_proj):
    """conv1(k1xk1)+bn1+relu -> conv2(3x3)+bn2 + shortcut -> relu, one image/step."""
    if has_proj:
        (x_ref, w1_ref, s1_ref, b1_ref, w2_ref, s2_ref, b2_ref,
         ws_ref, ss_ref, bs_ref, o_ref, slab1_ref, y1p_ref, slab2_ref) = refs
    else:
        (x_ref, w1_ref, s1_ref, b1_ref, w2_ref, s2_ref, b2_ref,
         o_ref, slab1_ref, y1p_ref, slab2_ref) = refs

    cin_p = x_ref.shape[-1]
    cmid_p = y1p_ref.shape[-1]
    m = o_ref.shape[0]                               # ho * wo (one image)

    # ---- conv1: build the (m, k1*k1*cin_p) tap slab (lane offsets are
    #      multiples of 128 -> dense stores), then ONE MXU matmul.
    for dy in range(k1):
        for dx in range(k1):
            t = dy * k1 + dx
            slab1_ref[:, t * cin_p:(t + 1) * cin_p] = (
                x_ref[:, dy:dy + ho, dx:dx + wo, :].reshape(m, cin_p))
    acc1 = jnp.dot(slab1_ref[...], w1_ref[...],
                   preferred_element_type=jnp.float32)
    y1 = jnp.maximum(acc1 * s1_ref[...] + b1_ref[...], 0.0)

    # ---- conv1 activation stays on-chip, spatially padded for conv2's 3x3.
    #      Interior starts at W offset 8 -> sublane-aligned dense store; only
    #      the 1-wide halo actually read by conv2 is zeroed.
    zrow = jnp.zeros((1, 1, wo + 2, cmid_p), y1p_ref.dtype)
    zcol = jnp.zeros((1, ho + 2, 1, cmid_p), y1p_ref.dtype)
    y1p_ref[:, 0:1, W_OFF - 1:W_OFF + wo + 1, :] = zrow
    y1p_ref[:, ho + 1:ho + 2, W_OFF - 1:W_OFF + wo + 1, :] = zrow
    y1p_ref[:, :, W_OFF - 1:W_OFF, :] = zcol
    y1p_ref[:, :, W_OFF + wo:W_OFF + wo + 1, :] = zcol
    y1p_ref[:, 1:1 + ho, W_OFF:W_OFF + wo, :] = (
        y1.reshape(1, ho, wo, cmid_p).astype(y1p_ref.dtype))

    # ---- shortcut: the centre tap (dy,dx)=(1,1) is already in slab1.
    t_c = k1 + 1
    x_c = slab1_ref[:, t_c * cin_p:(t_c + 1) * cin_p]
    if has_proj:
        sc = jnp.dot(x_c, ws_ref[...], preferred_element_type=jnp.float32)
        sc = sc * ss_ref[...] + bs_ref[...]
    else:
        sc = x_c.astype(jnp.float32)

    # ---- conv2: tap slab + single MXU matmul, then f32 epilogue on the VPU.
    for dy in range(3):
        for dx in range(3):
            t = dy * 3 + dx
            slab2_ref[:, t * cmid_p:(t + 1) * cmid_p] = (
                y1p_ref[:, dy:dy + ho,
                        W_OFF - 1 + dx:W_OFF - 1 + dx + wo, :]
                .reshape(m, cmid_p))
    acc2 = jnp.dot(slab2_ref[...], w2_ref[...],
                   preferred_element_type=jnp.float32)
    out = jnp.maximum(acc2 * s2_ref[...] + b2_ref[...] + sc, 0.0)
    o_ref[...] = out.astype(o_ref.dtype)


# ------------------------------- Host wrappers ------------------------------ #

def _fold_bn(bn):
    gamma, beta, mean, var = bn
    scale = gamma / jnp.sqrt(var + EPS)
    bias = beta - mean * scale
    return scale.astype(jnp.float32), bias.astype(jnp.float32)


def _pad_to(a, shape):
    return jnp.pad(a, [(0, t - s) for s, t in zip(a.shape, shape)])


def _space_to_depth2(x):
    """NHWC pixel-unshuffle by 2: (N,H,W,C) -> (N,H/2,W/2,4C), phase=(2*pi+pj)."""
    n, h, w, c = x.shape
    x = x.reshape(n, h // 2, 2, w // 2, 2, c)
    x = jnp.transpose(x, (0, 1, 3, 2, 4, 5))
    return x.reshape(n, h // 2, w // 2, 4 * c)


def residual_block_nhwc(x, params, stride, *, compute_dtype=jnp.bfloat16):
    """Fused ResidualBlock forward, NHWC in / NHWC out.

    compute_dtype: MXU-operand / VMEM-scratch dtype (bf16 default; accumulation
    and the BN/residual/ReLU epilogue are always f32).
    """
    n, h, w, cin = x.shape
    w1 = params["w1"]                       # (cout, cin, 3, 3)
    w2 = params["w2"]                       # (cout, cout, 3, 3)
    cout = w1.shape[0]
    has_proj = "ws" in params
    assert stride in (1, 2), "ResNet basic block uses stride 1 or 2"

    cmid_p = _round_up(cout, LANE)
    cout_p = cmid_p

    s1, b1 = _fold_bn(params["bn1"])
    s2, b2 = _fold_bn(params["bn2"])

    w1_t = jnp.transpose(w1, (2, 3, 1, 0))                     # (3,3,cin,cout)
    w2_t = jnp.transpose(w2, (2, 3, 1, 0)).reshape(9, cout, cout)

    if stride == 1:
        ho, wo, k1 = h, w, 3
        cin_p = _round_up(cin, LANE)
        x_k = jnp.pad(x, ((0, 0), (1, 1), (1, 1), (0, cin_p - cin)))
        w1_slab = _pad_to(w1_t.reshape(9, cin, cout),
                          (9, cin_p, cmid_p)).reshape(9 * cin_p, cmid_p)
    else:
        assert h % 2 == 0 and w % 2 == 0, "stride-2 path expects even H, W"
        ho, wo, k1 = h // 2, w // 2, 2
        cin_p = _round_up(4 * cin, LANE)
        # stride-2 3x3 conv == stride-1 2x2 conv on the pixel-unshuffled input,
        # padded by 1 on top/left only.
        x_s2d = _space_to_depth2(x)                            # (n,ho,wo,4cin)
        x_k = jnp.pad(x_s2d, ((0, 0), (1, 0), (1, 0), (0, cin_p - 4 * cin)))
        w1_k = jnp.zeros((4, cin_p, cmid_p), w1.dtype)
        for ty in range(2):
            for tx in range(2):
                for pi in range(2):
                    for pj in range(2):
                        dy, dx = 2 * ty + pi - 1, 2 * tx + pj - 1
                        if 0 <= dy < 3 and 0 <= dx < 3:
                            ph = 2 * pi + pj
                            w1_k = w1_k.at[ty * 2 + tx,
                                           ph * cin:(ph + 1) * cin,
                                           :cout].set(w1_t[dy, dx])
        w1_slab = w1_k.reshape(4 * cin_p, cmid_p)

    w2_slab = _pad_to(w2_t, (9, cmid_p, cout_p)).reshape(9 * cmid_p, cout_p)
    hp, wp = x_k.shape[1], x_k.shape[2]
    mo = ho * wo                                  # output rows per grid step

    args = [x_k.astype(compute_dtype), w1_slab.astype(compute_dtype),
            _pad_to(s1[None, :], (1, cmid_p)), _pad_to(b1[None, :], (1, cmid_p)),
            w2_slab.astype(compute_dtype),
            _pad_to(s2[None, :], (1, cout_p)), _pad_to(b2[None, :], (1, cout_p))]
    in_specs = [
        pl.BlockSpec((1, hp, wp, cin_p), lambda i: (i, 0, 0, 0)),
        pl.BlockSpec((k1 * k1 * cin_p, cmid_p), lambda i: (0, 0)),
        pl.BlockSpec((1, cmid_p), lambda i: (0, 0)),
        pl.BlockSpec((1, cmid_p), lambda i: (0, 0)),
        pl.BlockSpec((9 * cmid_p, cout_p), lambda i: (0, 0)),
        pl.BlockSpec((1, cout_p), lambda i: (0, 0)),
        pl.BlockSpec((1, cout_p), lambda i: (0, 0)),
    ]

    if has_proj:
        ws = params["ws"][:, :, 0, 0]             # (cout, cin)
        ss, bs = _fold_bn(params["bns"])
        # In the space-to-depth layout the stride-2 1x1 conv reads only phase
        # (0,0) == first `cin` channels of the centre tap -> same placement.
        ws_k = _pad_to(jnp.transpose(ws, (1, 0)), (cin_p, cout_p))
        args += [ws_k.astype(compute_dtype),
                 _pad_to(ss[None, :], (1, cout_p)),
                 _pad_to(bs[None, :], (1, cout_p))]
        in_specs += [
            pl.BlockSpec((cin_p, cout_p), lambda i: (0, 0)),
            pl.BlockSpec((1, cout_p), lambda i: (0, 0)),
            pl.BlockSpec((1, cout_p), lambda i: (0, 0)),
        ]

    kernel = functools.partial(_fused_block_kernel,
                               ho=ho, wo=wo, k1=k1, has_proj=has_proj)

    out2d = pl.pallas_call(
        kernel,
        out_shape=jax.ShapeDtypeStruct((n * mo, cout_p), x.dtype),
        grid=(n,),                                 # batch images are independent
        in_specs=in_specs,
        out_specs=pl.BlockSpec((mo, cout_p), lambda i: (i, 0)),
        scratch_shapes=[
            pltpu.VMEM((mo, k1 * k1 * cin_p), compute_dtype),          # conv1 slab
            pltpu.VMEM((1, ho + 2, W_OFF + wo + 1, cmid_p), compute_dtype),
            pltpu.VMEM((mo, 9 * cmid_p), compute_dtype),               # conv2 slab
        ],
        compiler_params=pltpu.CompilerParams(
            dimension_semantics=("parallel",),     # v7x: 2 TCs split the batch
            vmem_limit_bytes=32 * 1024 * 1024),    # TODO(synk): per-gen tuning
    )(*args)

    # Drop channel padding (lane padding kept every in-kernel store 128-dense).
    return out2d.reshape(n, ho, wo, cout_p)[..., :cout]


def residual_block_forward(x_nchw, params, stride, *, compute_dtype=jnp.bfloat16):
    # NOTE: keep activations NHWC (and lane-padded) end-to-end when chaining
    # blocks; these transposes exist only for the standalone NCHW boundary.
    x = jnp.transpose(x_nchw, (0, 2, 3, 1))
    y = residual_block_nhwc(x, params, stride, compute_dtype=compute_dtype)
    return jnp.transpose(y, (0, 3, 1, 2))


# -------------------------------- Reference --------------------------------- #

def _ref_conv(x, w, stride, pad):
    return jax.lax.conv_general_dilated(
        x, w, (stride, stride), [(pad, pad), (pad, pad)],
        dimension_numbers=("NCHW", "OIHW", "NCHW"))


def _ref_bn(x, bn):
    g, b, m, v = bn
    g, b, m, v = (t[None, :, None, None] for t in (g, b, m, v))
    return g * (x - m) / jnp.sqrt(v + EPS) + b


def residual_block_reference(x, params, stride):
    out = jax.nn.relu(_ref_bn(_ref_conv(x, params["w1"], stride, 1), params["bn1"]))
    out = _ref_bn(_ref_conv(out, params["w2"], 1, 1), params["bn2"])
    if "ws" in params:
        sc = _ref_bn(_ref_conv(x, params["ws"], stride, 0), params["bns"])
    else:
        sc = x
    return jax.nn.relu(out + sc)


# ------------------------------- Param setup --------------------------------- #

def make_params(key, cin, cout, stride):
    keys = jax.random.split(key, 8)

    def bn_params(k):
        k1, k2, k3, k4 = jax.random.split(k, 4)
        gamma = 1.0 + 0.1 * jax.random.normal(k1, (cout,), jnp.float32)
        beta = 0.1 * jax.random.normal(k2, (cout,), jnp.float32)
        mean = 0.1 * jax.random.normal(k3, (cout,), jnp.float32)
        var = jax.random.uniform(k4, (cout,), jnp.float32, 0.5, 1.5)
        return (gamma, beta, mean, var)

    params = {
        "w1": 0.1 * jax.random.normal(keys[0], (cout, cin, 3, 3), jnp.float32),
        "bn1": bn_params(keys[1]),
        "w2": 0.1 * jax.random.normal(keys[2], (cout, cout, 3, 3), jnp.float32),
        "bn2": bn_params(keys[3]),
    }
    if stride != 1 or cin != cout:
        params["ws"] = 0.1 * jax.random.normal(keys[4], (cout, cin, 1, 1),
                                               jnp.float32)
        params["bns"] = bn_params(keys[5])
    return params


# ----------------------------------- Main ------------------------------------ #

if __name__ == "__main__":
    key = jax.random.PRNGKey(0)
    k_x1, k_p1, k_x2, k_p2 = jax.random.split(key, 4)

    # Case 1: projection shortcut (stride=2, channel change), x: (2, 4, 16, 16)
    x1 = jax.random.normal(k_x1, (2, 4, 16, 16), jnp.float32)
    p1 = make_params(k_p1, cin=4, cout=8, stride=2)

    # Case 2: identity shortcut (stride=1, same channels), x: (2, 8, 16, 16)
    x2 = jax.random.normal(k_x2, (2, 8, 16, 16), jnp.float32)
    p2 = make_params(k_p2, cin=8, cout=8, stride=1)

    cases = [(x1, p1, 2, (2, 8, 8, 8)),
             (x2, p2, 1, (2, 8, 16, 16))]

    for x, p, stride, oshape in cases:
        ref = residual_block_reference(x, p, stride)
        for dtype, tol in [(jnp.float32, 2e-2), (jnp.bfloat16, 1e-1)]:
            y = jax.block_until_ready(
                residual_block_forward(x, p, stride, compute_dtype=dtype))
            assert y.shape == oshape, (y.shape, oshape)
            err = float(jnp.max(jnp.abs(y - ref)))
            assert err < tol, (stride, str(dtype), err)

    print("KERNEL_OK")
</pallas_src>

<mosaic_0001>
module attributes {stable_mosaic.version = 11 : i64} {
  func.func @_fused_block_kernel(%arg0: i32, %arg1: memref<1x9x9x128xf32, #tpu.memory_space<vmem>>, %arg2: memref<512x128xf32, #tpu.memory_space<vmem>>, %arg3: memref<1x128xf32, #tpu.memory_space<vmem>>, %arg4: memref<1x128xf32, #tpu.memory_space<vmem>>, %arg5: memref<1152x128xf32, #tpu.memory_space<vmem>>, %arg6: memref<1x128xf32, #tpu.memory_space<vmem>>, %arg7: memref<1x128xf32, #tpu.memory_space<vmem>>, %arg8: memref<128x128xf32, #tpu.memory_space<vmem>>, %arg9: memref<1x128xf32, #tpu.memory_space<vmem>>, %arg10: memref<1x128xf32, #tpu.memory_space<vmem>>, %arg11: memref<64x128xf32, #tpu.memory_space<vmem>>, %arg12: memref<64x512xf32, #tpu.memory_space<vmem>>, %arg13: memref<1x10x17x128xf32, #tpu.memory_space<vmem>>, %arg14: memref<64x1152xf32, #tpu.memory_space<vmem>>) attributes {dimension_semantics = [#tpu.dimension_semantics<parallel>], iteration_bounds = array<i64: 2>, scalar_prefetch = 0 : i64, scratch_operands = 3 : i64, tpu.core_type = #tpu.core_type<tc>, window_params = [{transform_indices = @transform_0, window_bounds = array<i64: 1, 9, 9, 128>}, {pipeline_mode = #tpu.pipeline_mode<synchronous>, transform_indices = @transform_1, window_bounds = array<i64: 512, 128>}, {pipeline_mode = #tpu.pipeline_mode<synchronous>, transform_indices = @transform_2, window_bounds = array<i64: 1, 128>}, {pipeline_mode = #tpu.pipeline_mode<synchronous>, transform_indices = @transform_3, window_bounds = array<i64: 1, 128>}, {pipeline_mode = #tpu.pipeline_mode<synchronous>, transform_indices = @transform_4, window_bounds = array<i64: 1152, 128>}, {pipeline_mode = #tpu.pipeline_mode<synchronous>, transform_indices = @transform_5, window_bounds = array<i64: 1, 128>}, {pipeline_mode = #tpu.pipeline_mode<synchronous>, transform_indices = @transform_6, window_bounds = array<i64: 1, 128>}, {pipeline_mode = #tpu.pipeline_mode<synchronous>, transform_indices = @transform_7, window_bounds = array<i64: 128, 128>}, {pipeline_mode = #tpu.pipeline_mode<synchronous>, transform_indices = @transform_8, window_bounds = array<i64: 1, 128>}, {pipeline_mode = #tpu.pipeline_mode<synchronous>, transform_indices = @transform_9, window_bounds = array<i64: 1, 128>}, {transform_indices = @transform_10, window_bounds = array<i64: 64, 128>}]} {
    %c0 = arith.constant 0 : index
    %c0_0 = arith.constant 0 : index
    %c0_1 = arith.constant 0 : index
    %c0_2 = arith.constant 0 : index
    %0 = vector.load %arg1[%c0, %c0_0, %c0_1, %c0_2] : memref<1x9x9x128xf32, #tpu.memory_space<vmem>>, vector<1x8x8x128xf32>
    %1 = vector.shape_cast %0 : vector<1x8x8x128xf32> to vector<64x128xf32>
    %c0_3 = arith.constant 0 : index
    %c0_4 = arith.constant 0 : index
    %2 = vector.load %arg12[%c0_3, %c0_4] : memref<64x512xf32, #tpu.memory_space<vmem>>, vector<64x128xf32>
    tpu.vector_store %arg12[%c0_3, %c0_4], %1 {strides = array<i32>} : memref<64x512xf32, #tpu.memory_space<vmem>>, vector<64x128xf32>,
    %c0_5 = arith.constant 0 : index
    %c0_6 = arith.constant 0 : index
    %c1 = arith.constant 1 : index
    %c0_7 = arith.constant 0 : index
    %3 = vector.load %arg1[%c0_5, %c0_6, %c1, %c0_7] : memref<1x9x9x128xf32, #tpu.memory_space<vmem>>, vector<1x8x8x128xf32>
    %4 = vector.shape_cast %3 : vector<1x8x8x128xf32> to vector<64x128xf32>
    %c0_8 = arith.constant 0 : index
    %c128 = arith.constant 128 : index
    %5 = vector.load %arg12[%c0_8, %c128] : memref<64x512xf32, #tpu.memory_space<vmem>>, vector<64x128xf32>
    tpu.vector_store %arg12[%c0_8, %c128], %4 {strides = array<i32>} : memref<64x512xf32, #tpu.memory_space<vmem>>, vector<64x128xf32>,
    %c0_9 = arith.constant 0 : index
    %c1_10 = arith.constant 1 : index
    %c0_11 = arith.constant 0 : index
    %c0_12 = arith.constant 0 : index
    %6 = vector.load %arg1[%c0_9, %c1_10, %c0_11, %c0_12] : memref<1x9x9x128xf32, #tpu.memory_space<vmem>>, vector<1x8x8x128xf32>
    %7 = vector.shape_cast %6 : vector<1x8x8x128xf32> to vector<64x128xf32>
    %c0_13 = arith.constant 0 : index
    %c256 = arith.constant 256 : index
    %8 = vector.load %arg12[%c0_13, %c256] : memref<64x512xf32, #tpu.memory_space<vmem>>, vector<64x128xf32>
    tpu.vector_store %arg12[%c0_13, %c256], %7 {strides = array<i32>} : memref<64x512xf32, #tpu.memory_space<vmem>>, vector<64x128xf32>,
    %c0_14 = arith.constant 0 : index
    %c1_15 = arith.constant 1 : index
    %c1_16 = arith.constant 1 : index
    %c0_17 = arith.constant 0 : index
    %9 = vector.load %arg1[%c0_14, %c1_15, %c1_16, %c0_17] : memref<1x9x9x128xf32, #tpu.memory_space<vmem>>, vector<1x8x8x128xf32>
    %10 = vector.shape_cast %9 : vector<1x8x8x128xf32> to vector<64x128xf32>
    %c0_18 = arith.constant 0 : index
    %c384 = arith.constant 384 : index
    %11 = vector.load %arg12[%c0_18, %c384] : memref<64x512xf32, #tpu.memory_space<vmem>>, vector<64x128xf32>
    tpu.vector_store %arg12[%c0_18, %c384], %10 {strides = array<i32>} : memref<64x512xf32, #tpu.memory_space<vmem>>, vector<64x128xf32>,
    %c0_19 = arith.constant 0 : index
    %c0_20 = arith.constant 0 : index
    %12 = vector.load %arg12[%c0_19, %c0_20] : memref<64x512xf32, #tpu.memory_space<vmem>>, vector<64x512xf32>
    %c0_21 = arith.constant 0 : index
    %c0_22 = arith.constant 0 : index
    %13 = vector.load %arg2[%c0_21, %c0_22] : memref<512x128xf32, #tpu.memory_space<vmem>>, vector<512x128xf32>
    %cst = arith.constant dense<0.000000e+00> : vector<64x128xf32>
    %14 = tpu.matmul %12, %13, %cst {dimension_numbers = #tpu.dot_dimension_numbers<[1], [0], [0], [1], [0, 0, 1, 1], [], []>} : vector<64x512xf32>, vector<512x128xf32>, vector<64x128xf32> -> vector<64x128xf32>
    %c0_23 = arith.constant 0 : index
    %c0_24 = arith.constant 0 : index
    %15 = vector.load %arg3[%c0_23, %c0_24] : memref<1x128xf32, #tpu.memory_space<vmem>>, vector<1x128xf32>
    %16 = vector.broadcast %15 : vector<1x128xf32> to vector<64x128xf32>
    %17 = arith.mulf %14, %16 : vector<64x128xf32>
    %c0_25 = arith.constant 0 : index
    %c0_26 = arith.constant 0 : index
    %18 = vector.load %arg4[%c0_25, %c0_26] : memref<1x128xf32, #tpu.memory_space<vmem>>, vector<1x128xf32>
    %19 = vector.broadcast %18 : vector<1x128xf32> to vector<64x128xf32>
    %20 = arith.addf %17, %19 : vector<64x128xf32>
    %cst_27 = arith.constant 0.000000e+00 : f32
    %21 = vector.broadcast %cst_27 : f32 to vector<64x128xf32>
    %22 = arith.maximumf %20, %21 : vector<64x128xf32>
    %cst_28 = arith.constant 0.000000e+00 : f32
    %23 = vector.broadcast %cst_28 : f32 to vector<1x1x10x128xf32>
    %cst_29 = arith.constant 0.000000e+00 : f32
    %24 = vector.broadcast %cst_29 : f32 to vector<1x10x1x128xf32>
    %c0_30 = arith.constant 0 : index
    %c0_31 = arith.constant 0 : index
    %c7 = arith.constant 7 : index
    %c0_32 = arith.constant 0 : index
    %25 = vector.load %arg13[%c0_30, %c0_31, %c7, %c0_32] : memref<1x10x17x128xf32, #tpu.memory_space<vmem>>, vector<1x1x10x128xf32>
    tpu.vector_store %arg13[%c0_30, %c0_31, %c7, %c0_32], %23 {strides = array<i32>} : memref<1x10x17x128xf32, #tpu.memory_space<vmem>>, vector<1x1x10x128xf32>,
    %c0_33 = arith.constant 0 : index
    %c9 = arith.constant 9 : index
    %c7_34 = arith.constant 7 : index
    %c0_35 = arith.constant 0 : index
    %26 = vector.load %arg13[%c0_33, %c9, %c7_34, %c0_35] : memref<1x10x17x128xf32, #tpu.memory_space<vmem>>, vector<1x1x10x128xf32>
    tpu.vector_store %arg13[%c0_33, %c9, %c7_34, %c0_35], %23 {strides = array<i32>} : memref<1x10x17x128xf32, #tpu.memory_space<vmem>>, vector<1x1x10x128xf32>,
    %c0_36 = arith.constant 0 : index
    %c0_37 = arith.constant 0 : index
    %c7_38 = arith.constant 7 : index
    %c0_39 = arith.constant 0 : index
    %27 = vector.load %arg13[%c0_36, %c0_37, %c7_38, %c0_39] : memref<1x10x17x128xf32, #tpu.memory_space<vmem>>, vector<1x10x1x128xf32>
    tpu.vector_store %arg13[%c0_36, %c0_37, %c7_38, %c0_39], %24 {strides = array<i32>} : memref<1x10x17x128xf32, #tpu.memory_space<vmem>>, vector<1x10x1x128xf32>,
    %c0_40 = arith.constant 0 : index
    %c0_41 = arith.constant 0 : index
    %c16 = arith.constant 16 : index
    %c0_42 = arith.constant 0 : index
    %28 = vector.load %arg13[%c0_40, %c0_41, %c16, %c0_42] : memref<1x10x17x128xf32, #tpu.memory_space<vmem>>, vector<1x10x1x128xf32>
    tpu.vector_store %arg13[%c0_40, %c0_41, %c16, %c0_42], %24 {strides = array<i32>} : memref<1x10x17x128xf32, #tpu.memory_space<vmem>>, vector<1x10x1x128xf32>,
    %29 = vector.shape_cast %22 : vector<64x128xf32> to vector<1x8x8x128xf32>
    %c0_43 = arith.constant 0 : index
    %c1_44 = arith.constant 1 : index
    %c8 = arith.constant 8 : index
    %c0_45 = arith.constant 0 : index
    %30 = vector.load %arg13[%c0_43, %c1_44, %c8, %c0_45] : memref<1x10x17x128xf32, #tpu.memory_space<vmem>>, vector<1x8x8x128xf32>
    tpu.vector_store %arg13[%c0_43, %c1_44, %c8, %c0_45], %29 {strides = array<i32>} : memref<1x10x17x128xf32, #tpu.memory_space<vmem>>, vector<1x8x8x128xf32>,
    %c0_46 = arith.constant 0 : index
    %c384_47 = arith.constant 384 : index
    %31 = vector.load %arg12[%c0_46, %c384_47] : memref<64x512xf32, #tpu.memory_space<vmem>>, vector<64x128xf32>
    %c0_48 = arith.constant 0 : index
    %c0_49 = arith.constant 0 : index
    %32 = vector.load %arg8[%c0_48, %c0_49] : memref<128x128xf32, #tpu.memory_space<vmem>>, vector<128x128xf32>
    %cst_50 = arith.constant dense<0.000000e+00> : vector<64x128xf32>
    %33 = tpu.matmul %31, %32, %cst_50 {dimension_numbers = #tpu.dot_dimension_numbers<[1], [0], [0], [1], [0, 0, 1, 1], [], []>} : vector<64x128xf32>, vector<128x128xf32>, vector<64x128xf32> -> vector<64x128xf32>
    %c0_51 = arith.constant 0 : index
    %c0_52 = arith.constant 0 : index
    %34 = vector.load %arg9[%c0_51, %c0_52] : memref<1x128xf32, #tpu.memory_space<vmem>>, vector<1x128xf32>
    %35 = vector.broadcast %34 : vector<1x128xf32> to vector<64x128xf32>
    %36 = arith.mulf %33, %35 : vector<64x128xf32>
    %c0_53 = arith.constant 0 : index
    %c0_54 = arith.constant 0 : index
    %37 = vector.load %arg10[%c0_53, %c0_54] : memref<1x128xf32, #tpu.memory_space<vmem>>, vector<1x128xf32>
    %38 = vector.broadcast %37 : vector<1x128xf32> to vector<64x128xf32>
    %39 = arith.addf %36, %38 : vector<64x128xf32>
    %c0_55 = arith.constant 0 : index
    %c0_56 = arith.constant 0 : index
    %c7_57 = arith.constant 7 : index
    %c0_58 = arith.constant 0 : index
    %40 = vector.load %arg13[%c0_55, %c0_56, %c7_57, %c0_58] : memref<1x10x17x128xf32, #tpu.memory_space<vmem>>, vector<1x8x8x128xf32>
    %41 = vector.shape_cast %40 : vector<1x8x8x128xf32> to vector<64x128xf32>
    %c0_59 = arith.constant 0 : index
    %c0_60 = arith.constant 0 : index
    %42 = vector.load %arg14[%c0_59, %c0_60] : memref<64x1152xf32, #tpu.memory_space<vmem>>, vector<64x128xf32>
    tpu.vector_store %arg14[%c0_59, %c0_60], %41 {strides = array<i32>} : memref<64x1152xf32, #tpu.memory_space<vmem>>, vector<64x128xf32>,
    %c0_61 = arith.constant 0 : index
    %c0_62 = arith.constant 0 : index
    %c8_63 = arith.constant 8 : index
    %c0_64 = arith.constant 0 : index
    %43 = vector.load %arg13[%c0_61, %c0_62, %c8_63, %c0_64] : memref<1x10x17x128xf32, #tpu.memory_space<vmem>>, vector<1x8x8x128xf32>
    %44 = vector.shape_cast %43 : vector<1x8x8x128xf32> to vector<64x128xf32>
    %c0_65 = arith.constant 0 : index
    %c128_66 = arith.constant 128 : index
    %45 = vector.load %arg14[%c0_65, %c128_66] : memref<64x1152xf32, #tpu.memory_space<vmem>>, vector<64x128xf32>
    tpu.vector_store %arg14[%c0_65, %c128_66], %44 {strides = array<i32>} : memref<64x1152xf32, #tpu.memory_space<vmem>>, vector<64x128xf32>,
    %c0_67 = arith.constant 0 : index
    %c0_68 = arith.constant 0 : index
    %c9_69 = arith.constant 9 : index
    %c0_70 = arith.constant 0 : index
    %46 = vector.load %arg13[%c0_67, %c0_68, %c9_69, %c0_70] : memref<1x10x17x128xf32, #tpu.memory_space<vmem>>, vector<1x8x8x128xf32>
    %47 = vector.shape_cast %46 : vector<1x8x8x128xf32> to vector<64x128xf32>
    %c0_71 = arith.constant 0 : index
    %c256_72 = arith.constant 256 : index
    %48 = vector.load %arg14[%c0_71, %c256_72] : memref<64x1152xf32, #tpu.memory_space<vmem>>, vector<64x128xf32>
    tpu.vector_store %arg14[%c0_71, %c256_72], %47 {strides = array<i32>} : memref<64x1152xf32, #tpu.memory_space<vmem>>, vector<64x128xf32>,
    %c0_73 = arith.constant 0 : index
    %c1_74 = arith.constant 1 : index
    %c7_75 = arith.constant 7 : index
    %c0_76 = arith.constant 0 : index
    %49 = vector.load %arg13[%c0_73, %c1_74, %c7_75, %c0_76] : memref<1x10x17x128xf32, #tpu.memory_space<vmem>>, vector<1x8x8x128xf32>
    %50 = vector.shape_cast %49 : vector<1x8x8x128xf32> to vector<64x128xf32>
    %c0_77 = arith.constant 0 : index
    %c384_78 = arith.constant 384 : index
    %51 = vector.load %arg14[%c0_77, %c384_78] : memref<64x1152xf32, #tpu.memory_space<vmem>>, vector<64x128xf32>
    tpu.vector_store %arg14[%c0_77, %c384_78], %50 {strides = array<i32>} : memref<64x1152xf32, #tpu.memory_space<vmem>>, vector<64x128xf32>,
    %c0_79 = arith.constant 0 : index
    %c1_80 = arith.constant 1 : index
    %c8_81 = arith.constant 8 : index
    %c0_82 = arith.constant 0 : index
    %52 = vector.load %arg13[%c0_79, %c1_80, %c8_81, %c0_82] : memref<1x10x17x128xf32, #tpu.memory_space<vmem>>, vector<1x8x8x128xf32>
    %53 = vector.shape_cast %52 : vector<1x8x8x128xf32> to vector<64x128xf32>
    %c0_83 = arith.constant 0 : index
    %c512 = arith.constant 512 : index
    %54 = vector.load %arg14[%c0_83, %c512] : memref<64x1152xf32, #tpu.memory_space<vmem>>, vector<64x128xf32>
    tpu.vector_store %arg14[%c0_83, %c512], %53 {strides = array<i32>} : memref<64x1152xf32, #tpu.memory_space<vmem>>, vector<64x128xf32>,
    %c0_84 = arith.constant 0 : index
    %c1_85 = arith.constant 1 : index
    %c9_86 = arith.constant 9 : index
    %c0_87 = arith.constant 0 : index
    %55 = vector.load %arg13[%c0_84, %c1_85, %c9_86, %c0_87] : memref<1x10x17x128xf32, #tpu.memory_space<vmem>>, vector<1x8x8x128xf32>
    %56 = vector.shape_cast %55 : vector<1x8x8x128xf32> to vector<64x128xf32>
    %c0_88 = arith.constant 0 : index
    %c640 = arith.constant 640 : index
    %57 = vector.load %arg14[%c0_88, %c640] : memref<64x1152xf32, #tpu.memory_space<vmem>>, vector<64x128xf32>
    tpu.vector_store %arg14[%c0_88, %c640], %56 {strides = array<i32>} : memref<64x1152xf32, #tpu.memory_space<vmem>>, vector<64x128xf32>,
    %c0_89 = arith.constant 0 : index
    %c2 = arith.constant 2 : index
    %c7_90 = arith.constant 7 : index
    %c0_91 = arith.constant 0 : index
    %58 = vector.load %arg13[%c0_89, %c2, %c7_90, %c0_91] : memref<1x10x17x128xf32, #tpu.memory_space<vmem>>, vector<1x8x8x128xf32>
    %59 = vector.shape_cast %58 : vector<1x8x8x128xf32> to vector<64x128xf32>
    %c0_92 = arith.constant 0 : index
    %c768 = arith.constant 768 : index
    %60 = vector.load %arg14[%c0_92, %c768] : memref<64x1152xf32, #tpu.memory_space<vmem>>, vector<64x128xf32>
    tpu.vector_store %arg14[%c0_92, %c768], %59 {strides = array<i32>} : memref<64x1152xf32, #tpu.memory_space<vmem>>, vector<64x128xf32>,
    %c0_93 = arith.constant 0 : index
    %c2_94 = arith.constant 2 : index
    %c8_95 = arith.constant 8 : index
    %c0_96 = arith.constant 0 : index
    %61 = vector.load %arg13[%c0_93, %c2_94, %c8_95, %c0_96] : memref<1x10x17x128xf32, #tpu.memory_space<vmem>>, vector<1x8x8x128xf32>
    %62 = vector.shape_cast %61 : vector<1x8x8x128xf32> to vector<64x128xf32>
    %c0_97 = arith.constant 0 : index
    %c896 = arith.constant 896 : index
    %63 = vector.load %arg14[%c0_97, %c896] : memref<64x1152xf32, #tpu.memory_space<vmem>>, vector<64x128xf32>
    tpu.vector_store %arg14[%c0_97, %c896], %62 {strides = array<i32>} : memref<64x1152xf32, #tpu.memory_space<vmem>>, vector<64x128xf32>,
    %c0_98 = arith.constant 0 : index
    %c2_99 = arith.constant 2 : index
    %c9_100 = arith.constant 9 : index
    %c0_101 = arith.constant 0 : index
    %64 = vector.load %arg13[%c0_98, %c2_99, %c9_100, %c0_101] : memref<1x10x17x128xf32, #tpu.memory_space<vmem>>, vector<1x8x8x128xf32>
    %65 = vector.shape_cast %64 : vector<1x8x8x128xf32> to vector<64x128xf32>
    %c0_102 = arith.constant 0 : index
    %c1024 = arith.constant 1024 : index
    %66 = vector.load %arg14[%c0_102, %c1024] : memref<64x1152xf32, #tpu.memory_space<vmem>>, vector<64x128xf32>
    tpu.vector_store %arg14[%c0_102, %c1024], %65 {strides = array<i32>} : memref<64x1152xf32, #tpu.memory_space<vmem>>, vector<64x128xf32>,
    %c0_103 = arith.constant 0 : index
    %c0_104 = arith.constant 0 : index
    %67 = vector.load %arg14[%c0_103, %c0_104] : memref<64x1152xf32, #tpu.memory_space<vmem>>, vector<64x1152xf32>
    %c0_105 = arith.constant 0 : index
    %c0_106 = arith.constant 0 : index
    %68 = vector.load %arg5[%c0_105, %c0_106] : memref<1152x128xf32, #tpu.memory_space<vmem>>, vector<1152x128xf32>
    %cst_107 = arith.constant dense<0.000000e+00> : vector<64x128xf32>
    %69 = tpu.matmul %67, %68, %cst_107 {dimension_numbers = #tpu.dot_dimension_numbers<[1], [0], [0], [1], [0, 0, 1, 1], [], []>} : vector<64x1152xf32>, vector<1152x128xf32>, vector<64x128xf32> -> vector<64x128xf32>
    %c0_108 = arith.constant 0 : index
    %c0_109 = arith.constant 0 : index
    %70 = vector.load %arg6[%c0_108, %c0_109] : memref<1x128xf32, #tpu.memory_space<vmem>>, vector<1x128xf32>
    %71 = vector.broadcast %70 : vector<1x128xf32> to vector<64x128xf32>
    %72 = arith.mulf %69, %71 : vector<64x128xf32>
    %c0_110 = arith.constant 0 : index
    %c0_111 = arith.constant 0 : index
    %73 = vector.load %arg7[%c0_110, %c0_111] : memref<1x128xf32, #tpu.memory_space<vmem>>, vector<1x128xf32>
    %74 = vector.broadcast %73 : vector<1x128xf32> to vector<64x128xf32>
    %75 = arith.addf %72, %74 : vector<64x128xf32>
    %76 = arith.addf %75, %39 : vector<64x128xf32>
    %cst_112 = arith.constant 0.000000e+00 : f32
    %77 = vector.broadcast %cst_112 : f32 to vector<64x128xf32>
    %78 = arith.maximumf %76, %77 : vector<64x128xf32>
    %c0_113 = arith.constant 0 : index
    %c0_114 = arith.constant 0 : index
    %79 = vector.load %arg11[%c0_113, %c0_114] : memref<64x128xf32, #tpu.memory_space<vmem>>, vector<64x128xf32>
    tpu.vector_store %arg11[%c0_113, %c0_114], %78 {strides = array<i32>} : memref<64x128xf32, #tpu.memory_space<vmem>>, vector<64x128xf32>,
    return
  }
  func.func @transform_0(%arg0: i32) -> (i32, i32, i32, i32) {
    %c0_i32 = arith.constant 0 : i32
    %c0_i32_0 = arith.constant 0 : i32
    %c0_i32_1 = arith.constant 0 : i32
    %c0_i32_2 = arith.constant 0 : i32
    return %arg0, %c0_i32, %c0_i32_0, %c0_i32_1 : i32, i32, i32, i32
  }
  func.func @transform_1(%arg0: i32) -> (i32, i32) {
    %c0_i32 = arith.constant 0 : i32
    %c0_i32_0 = arith.constant 0 : i32
    %c0_i32_1 = arith.constant 0 : i32
    return %c0_i32, %c0_i32_0 : i32, i32
  }
  func.func @transform_2(%arg0: i32) -> (i32, i32) {
    %c0_i32 = arith.constant 0 : i32
    %c0_i32_0 = arith.constant 0 : i32
    %c0_i32_1 = arith.constant 0 : i32
    return %c0_i32, %c0_i32_0 : i32, i32
  }
  func.func @transform_3(%arg0: i32) -> (i32, i32) {
    %c0_i32 = arith.constant 0 : i32
    %c0_i32_0 = arith.constant 0 : i32
    %c0_i32_1 = arith.constant 0 : i32
    return %c0_i32, %c0_i32_0 : i32, i32
  }
  func.func @transform_4(%arg0: i32) -> (i32, i32) {
    %c0_i32 = arith.constant 0 : i32
    %c0_i32_0 = arith.constant 0 : i32
    %c0_i32_1 = arith.constant 0 : i32
    return %c0_i32, %c0_i32_0 : i32, i32
  }
  func.func @transform_5(%arg0: i32) -> (i32, i32) {
    %c0_i32 = arith.constant 0 : i32
    %c0_i32_0 = arith.constant 0 : i32
    %c0_i32_1 = arith.constant 0 : i32
    return %c0_i32, %c0_i32_0 : i32, i32
  }
  func.func @transform_6(%arg0: i32) -> (i32, i32) {
    %c0_i32 = arith.constant 0 : i32
    %c0_i32_0 = arith.constant 0 : i32
    %c0_i32_1 = arith.constant 0 : i32
    return %c0_i32, %c0_i32_0 : i32, i32
  }
  func.func @transform_7(%arg0: i32) -> (i32, i32) {
    %c0_i32 = arith.constant 0 : i32
    %c0_i32_0 = arith.constant 0 : i32
    %c0_i32_1 = arith.constant 0 : i32
    return %c0_i32, %c0_i32_0 : i32, i32
  }
  func.func @transform_8(%arg0: i32) -> (i32, i32) {
    %c0_i32 = arith.constant 0 : i32
    %c0_i32_0 = arith.constant 0 : i32
    %c0_i32_1 = arith.constant 0 : i32
    return %c0_i32, %c0_i32_0 : i32, i32
  }
  func.func @transform_9(%arg0: i32) -> (i32, i32) {
    %c0_i32 = arith.constant 0 : i32
    %c0_i32_0 = arith.constant 0 : i32
    %c0_i32_1 = arith.constant 0 : i32
    return %c0_i32, %c0_i32_0 : i32, i32
  }
  func.func @transform_10(%arg0: i32) -> (i32, i32) {
    %c0_i32 = arith.constant 0 : i32
    %c0_i32_0 = arith.constant 0 : i32
    return %arg0, %c0_i32 : i32, i32
  }
}

</mosaic_0001>

<llo_original>
// kernel: tpu_custom_call.1
$region0: #{tpu_custom_call.1}
  #allocation0 [shape = 'u32[]', space=smem, size = 0x4, offset = 0x4, fixed_abs, tag = 'smem constant byte address 0x4 - core index']
  #allocation1 [shape = 'u32[144,128]{1,0:T(1,128)}', space=vmem, size = 0x12000, scoped, tag = 'internal scratch']
  #allocation2 [shape = 'f32[64,512]{1,0:T(8,128)}', space=vmem, size = 0x20000, scoped, tag = 'scratch operand']
  #allocation3 [shape = 'f32[1,10,17,128]{3,2,1,0:T(8,128)}', space=vmem, size = 0x1e000, scoped, tag = 'scratch operand']
  #allocation4 [shape = 'f32[64,1152]{1,0:T(8,128)}', space=vmem, size = 0x48000, scoped, tag = 'scratch operand']
  %s0 = inlined_call_operand.vmem [shape: f32[2,9,9,128], index: 0, kind: input, shape index: {}]
  %s1 = inlined_call_operand.hbm [shape: f32[512,128], index: 1, kind: input, shape index: {}]
  %s2 = inlined_call_operand.vmem [shape: f32[1,128], index: 2, kind: input, shape index: {}]
  %s3 = inlined_call_operand.vmem [shape: f32[1,128], index: 3, kind: input, shape index: {}]
  %s4 = inlined_call_operand.hbm [shape: f32[1152,128], index: 4, kind: input, shape index: {}]
  %s5 = inlined_call_operand.vmem [shape: f32[1,128], index: 5, kind: input, shape index: {}]
  %s6 = inlined_call_operand.vmem [shape: f32[1,128], index: 6, kind: input, shape index: {}]
  %s7 = inlined_call_operand.vmem [shape: f32[128,128], index: 7, kind: input, shape index: {}]
  %s8 = inlined_call_operand.vmem [shape: f32[1,128], index: 8, kind: input, shape index: {}]
  %s9 = inlined_call_operand.vmem [shape: f32[1,128], index: 9, kind: input, shape index: {}]
  %s10 = inlined_call_operand.hbm [shape: f32[128,128], index: 10, kind: output, shape index: {}]
  %s11 = sld [smem:[#allocation0]]
  $region81: #{tpu_custom_call.1} parent=0
    _
  %s13 = ssub.s32 1, %s11
  %s14 = scalar_select 0, %s13, %s11
  $region1: #{tpu_custom_call.1} parent=0
    #allocation5 [shape = 'u8[262144]{0}', space=vmem, size = 0x40000, scoped, tag = 'input window, operand 1, single buffered']
    #allocation6 [shape = 's32[2]{0}', space=sflag, size = 0x8, scoped, tag = 'scoped memory for tpu_custom_call.1']
    #allocation7 [shape = 's32[2]{0}', space=sflag, size = 0x8, scoped, tag = 'scoped memory for tpu_custom_call.1']
    #allocation8 [shape = 'u8[589824]{0}', space=vmem, size = 0x90000, scoped, tag = 'input window, operand 4, single buffered']
    #allocation9 [shape = 's32[1]{0}', space=sflag, size = 0x4, scoped, tag = 'scoped memory for tpu_custom_call.1']
    #allocation10 [shape = 'u8[65536]{0}', space=vmem, size = 0x10000, scoped, tag = 'output window, operand 0']
    %15 = vsyncpa [#allocation6], 0
    %16 = vsyncpa [#allocation9], 0
    %17 = vsyncpa [#allocation7], 0
    %s18 = scalar_lea.sflag [#allocation7], 1
    %19 = vsyncpa %s18, 0
    loop: start=0, step=1, limit=4
    $region2: #{tpu_custom_call.1} parent=1 // loop_pre_header
      _
    $region3: #{tpu_custom_call.1} parent=1 // loop_header
      %s21 = sphi 0, %s25
      %p22 = scmp.ge.s32.totalorder %s21, 4
      %s31 = sphi 0, %s33
      %s34 = sphi 0, %s31
      %s35 = sphi 0, %s34
      %s51 = sphi 0, %s35
      %s55 = sphi 0, %s55
      %s57 = sphi 0, %s55
      %s58 = sphi 0, %s57
      %s72 = sphi 0, %s58
      %s76 = sphi 0, %s76
      %s78 = sphi 0, %s76
      %s79 = sphi 0, %s78
      %s93 = sphi 0, %s79
      %s97 = sphi 0, %s97
      %s99 = sphi 0, %s97
      %s100 = sphi 0, %s99
      %s114 = sphi 0, %s100
      %s118 = sphi 0, %s118
      %s120 = sphi 0, %s118
      %s121 = sphi 0, %s120
      %s135 = sphi 0, %s121
      %s139 = sphi 0, %s139
      %s141 = sphi 0, %s139
      %s142 = sphi 0, %s141
      %s156 = sphi 0, %s142
      %s160 = sphi 0, %s160
      %s162 = sphi 0, %s160
      %s163 = sphi 0, %s162
      %s177 = sphi 0, %s163
      %s181 = sphi 0, %s181
      %s183 = sphi 0, %s181
      %s184 = sphi 0, %s183
      %s198 = sphi 0, %s184
      %s202 = sphi 0, %s202
      %s204 = sphi 0, %s202
      %s205 = sphi 0, %s204
      %s219 = sphi 0, %s205
      %s223 = sphi 0, %s223
      %s225 = sphi 0, %s223
      %s226 = sphi 0, %s225
      %s240 = sphi 0, %s226
      %s246 = sphi 0, %s248
      %s249 = sphi 0, %s246
      %s250 = sphi 0, %s249
      %s266 = sphi 0, %s250
    $region4: #{tpu_custom_call.1} parent=1 // loop_header_branch
      %24 = sbr.rel (%p22) target = $region8
    $region5: #{tpu_custom_call.1} parent=1 // loop_body
      %s26 = ssub.s32 %s21, 1
      %s27 = ssub.s32 %s21, 2
      %s28 = sadd.s32 %s21, 1
      %s29 = ssub.s32 %s21, %s28
      %p30 = scmp.eq.s32.totalorder %s29, 0
      %s32 = sadd.s32 %s31, 1
      %s33 = scalar_select %p30, %s31, %s32
      %p36 = pneg %p30
      %p37 = scmp.eq.s32.totalorder %s21, 1
      %p38 = por %p36, %p37
      %p39 = scmp.ne.s32.totalorder %s31, %s34
      %p40 = scmp.eq.s32.totalorder %s21, 0
      %p41 = por %p39, %p40
      %p42 = scmp.ne.s32.totalorder %s31, %s34
      %p43 = scmp.eq.s32.totalorder %s26, 1
      %p44 = por %p42, %p43
      %p45 = scmp.ne.s32.totalorder %s34, %s35
      %p46 = scmp.eq.s32.totalorder %s26, 0
      %p47 = por %p45, %p46
      %p48 = scmp.ne.s32.totalorder %s34, %s35
      %p49 = scmp.eq.s32.totalorder %s27, 1
      %p50 = por %p48, %p49
      %p52 = scmp.ne.s32.totalorder %s35, %s51
      %p53 = scmp.eq.s32.totalorder %s27, 0
      %p54 = por %p52, %p53
      %s56 = sadd.s32 %s55, 1
      %p59 = scmp.eq.s32.totalorder %s21, 1
      %p60 = scmp.ne.s32.totalorder %s55, %s57
      %p61 = scmp.eq.s32.totalorder %s21, 0
      %p62 = por %p60, %p61
      %p63 = scmp.ne.s32.totalorder %s55, %s57
      %p64 = scmp.eq.s32.totalorder %s26, 1
      %p65 = por %p63, %p64
      %p66 = scmp.ne.s32.totalorder %s57, %s58
      %p67 = scmp.eq.s32.totalorder %s26, 0
      %p68 = por %p66, %p67
      %p69 = scmp.ne.s32.totalorder %s57, %s58
      %p70 = scmp.eq.s32.totalorder %s27, 1
      %p71 = por %p69, %p70
      %p73 = scmp.ne.s32.totalorder %s58, %s72
      %p74 = scmp.eq.s32.totalorder %s27, 0
      %p75 = por %p73, %p74
      %s77 = sadd.s32 %s76, 1
      %p80 = scmp.eq.s32.totalorder %s21, 1
      %p81 = scmp.ne.s32.totalorder %s76, %s78
      %p82 = scmp.eq.s32.totalorder %s21, 0
      %p83 = por %p81, %p82
      %p84 = scmp.ne.s32.totalorder %s76, %s78
      %p85 = scmp.eq.s32.totalorder %s26, 1
      %p86 = por %p84, %p85
      %p87 = scmp.ne.s32.totalorder %s78, %s79
      %p88 = scmp.eq.s32.totalorder %s26, 0
      %p89 = por %p87, %p88
      %p90 = scmp.ne.s32.totalorder %s78, %s79
      %p91 = scmp.eq.s32.totalorder %s27, 1
      %p92 = por %p90, %p91
      %p94 = scmp.ne.s32.totalorder %s79, %s93
      %p95 = scmp.eq.s32.totalorder %s27, 0
      %p96 = por %p94, %p95
      %s98 = sadd.s32 %s97, 1
      %p101 = scmp.eq.s32.totalorder %s21, 1
      %p102 = scmp.ne.s32.totalorder %s97, %s99
      %p103 = scmp.eq.s32.totalorder %s21, 0
      %p104 = por %p102, %p103
      %p105 = scmp.ne.s32.totalorder %s97, %s99
      %p106 = scmp.eq.s32.totalorder %s26, 1
      %p107 = por %p105, %p106
      %p108 = scmp.ne.s32.totalorder %s99, %s100
      %p109 = scmp.eq.s32.totalorder %s26, 0
      %p110 = por %p108, %p109
      %p111 = scmp.ne.s32.totalorder %s99, %s100
      %p112 = scmp.eq.s32.totalorder %s27, 1
      %p113 = por %p111, %p112
      %p115 = scmp.ne.s32.totalorder %s100, %s114
      %p116 = scmp.eq.s32.totalorder %s27, 0
      %p117 = por %p115, %p116
      %s119 = sadd.s32 %s118, 1
      %p122 = scmp.eq.s32.totalorder %s21, 1
      %p123 = scmp.ne.s32.totalorder %s118, %s120
      %p124 = scmp.eq.s32.totalorder %s21, 0
      %p125 = por %p123, %p124
      %p126 = scmp.ne.s32.totalorder %s118, %s120
      %p127 = scmp.eq.s32.totalorder %s26, 1
      %p128 = por %p126, %p127
      %p129 = scmp.ne.s32.totalorder %s120, %s121
      %p130 = scmp.eq.s32.totalorder %s26, 0
      %p131 = por %p129, %p130
      %p132 = scmp.ne.s32.totalorder %s120, %s121
      %p133 = scmp.eq.s32.totalorder %s27, 1
      %p134 = por %p132, %p133
      %p136 = scmp.ne.s32.totalorder %s121, %s135
      %p137 = scmp.eq.s32.totalorder %s27, 0
      %p138 = por %p136, %p137
      %s140 = sadd.s32 %s139, 1
      %p143 = scmp.eq.s32.totalorder %s21, 1
      %p144 = scmp.ne.s32.totalorder %s139, %s141
      %p145 = scmp.eq.s32.totalorder %s21, 0
      %p146 = por %p144, %p145
      %p147 = scmp.ne.s32.totalorder %s139, %s141
      %p148 = scmp.eq.s32.totalorder %s26, 1
      %p149 = por %p147, %p148
      %p150 = scmp.ne.s32.totalorder %s141, %s142
      %p151 = scmp.eq.s32.totalorder %s26, 0
      %p152 = por %p150, %p151
      %p153 = scmp.ne.s32.totalorder %s141, %s142
      %p154 = scmp.eq.s32.totalorder %s27, 1
      %p155 = por %p153, %p154
      %p157 = scmp.ne.s32.totalorder %s142, %s156
      %p158 = scmp.eq.s32.totalorder %s27, 0
      %p159 = por %p157, %p158
      %s161 = sadd.s32 %s160, 1
      %p164 = scmp.eq.s32.totalorder %s21, 1
      %p165 = scmp.ne.s32.totalorder %s160, %s162
      %p166 = scmp.eq.s32.totalorder %s21, 0
      %p167 = por %p165, %p166
      %p168 = scmp.ne.s32.totalorder %s160, %s162
      %p169 = scmp.eq.s32.totalorder %s26, 1
      %p170 = por %p168, %p169
      %p171 = scmp.ne.s32.totalorder %s162, %s163
      %p172 = scmp.eq.s32.totalorder %s26, 0
      %p173 = por %p171, %p172
      %p174 = scmp.ne.s32.totalorder %s162, %s163
      %p175 = scmp.eq.s32.totalorder %s27, 1
      %p176 = por %p174, %p175
      %p178 = scmp.ne.s32.totalorder %s163, %s177
      %p179 = scmp.eq.s32.totalorder %s27, 0
      %p180 = por %p178, %p179
      %s182 = sadd.s32 %s181, 1
      %p185 = scmp.eq.s32.totalorder %s21, 1
      %p186 = scmp.ne.s32.totalorder %s181, %s183
      %p187 = scmp.eq.s32.totalorder %s21, 0
      %p188 = por %p186, %p187
      %p189 = scmp.ne.s32.totalorder %s181, %s183
      %p190 = scmp.eq.s32.totalorder %s26, 1
      %p191 = por %p189, %p190
      %p192 = scmp.ne.s32.totalorder %s183, %s184
      %p193 = scmp.eq.s32.totalorder %s26, 0
      %p194 = por %p192, %p193
      %p195 = scmp.ne.s32.totalorder %s183, %s184
      %p196 = scmp.eq.s32.totalorder %s27, 1
      %p197 = por %p195, %p196
      %p199 = scmp.ne.s32.totalorder %s184, %s198
      %p200 = scmp.eq.s32.totalorder %s27, 0
      %p201 = por %p199, %p200
      %s203 = sadd.s32 %s202, 1
      %p206 = scmp.eq.s32.totalorder %s21, 1
      %p207 = scmp.ne.s32.totalorder %s202, %s204
      %p208 = scmp.eq.s32.totalorder %s21, 0
      %p209 = por %p207, %p208
      %p210 = scmp.ne.s32.totalorder %s202, %s204
      %p211 = scmp.eq.s32.totalorder %s26, 1
      %p212 = por %p210, %p211
      %p213 = scmp.ne.s32.totalorder %s204, %s205
      %p214 = scmp.eq.s32.totalorder %s26, 0
      %p215 = por %p213, %p214
      %p216 = scmp.ne.s32.totalorder %s204, %s205
      %p217 = scmp.eq.s32.totalorder %s27, 1
      %p218 = por %p216, %p217
      %p220 = scmp.ne.s32.totalorder %s205, %s219
      %p221 = scmp.eq.s32.totalorder %s27, 0
      %p222 = por %p220, %p221
      %s224 = sadd.s32 %s223, 1
      %p227 = scmp.eq.s32.totalorder %s21, 1
      %p228 = scmp.ne.s32.totalorder %s223, %s225
      %p229 = scmp.eq.s32.totalorder %s21, 0
      %p230 = por %p228, %p229
      %p231 = scmp.ne.s32.totalorder %s223, %s225
      %p232 = scmp.eq.s32.totalorder %s26, 1
      %p233 = por %p231, %p232
      %p234 = scmp.ne.s32.totalorder %s225, %s226
      %p235 = scmp.eq.s32.totalorder %s26, 0
      %p236 = por %p234, %p235
      %p237 = scmp.ne.s32.totalorder %s225, %s226
      %p238 = scmp.eq.s32.totalorder %s27, 1
      %p239 = por %p237, %p238
      %p241 = scmp.ne.s32.totalorder %s226, %s240
      %p242 = scmp.eq.s32.totalorder %s27, 0
      %p243 = por %p241, %p242
      %s244 = ssub.s32 %s21, %s28
      %p245 = scmp.eq.s32.totalorder %s244, 0
      %s247 = sadd.s32 %s246, 1
      %s248 = scalar_select %p245, %s246, %s247
      %p251 = pneg %p245
      %p252 = scmp.eq.s32.totalorder %s21, 1
      %p253 = por %p251, %p252
      %p254 = scmp.ne.s32.totalorder %s246, %s249
      %p255 = scmp.eq.s32.totalorder %s21, 0
      %p256 = por %p254, %p255
      %p257 = scmp.ne.s32.totalorder %s246, %s249
      %p258 = scmp.eq.s32.totalorder %s26, 1
      %p259 = por %p257, %p258
      %p260 = scmp.ne.s32.totalorder %s249, %s250
      %p261 = scmp.eq.s32.totalorder %s26, 0
      %p262 = por %p260, %p261
      %p263 = scmp.ne.s32.totalorder %s249, %s250
      %p264 = scmp.eq.s32.totalorder %s27, 1
      %p265 = por %p263, %p264
      %p267 = scmp.ne.s32.totalorder %s250, %s266
      %p268 = scmp.eq.s32.totalorder %s27, 0
      %p269 = por %p267, %p268
      %p270 = scmp.le.s32.totalorder 1, %s21
      %p271 = scmp.lt.s32.totalorder %s21, 3
      %p272 = pnand %p270, %p271
      %p273 = pneg %p272
      // Predicated region
      $region9: #{tpu_custom_call.1} parent=5 // pred_check
        _
      $region10: #{tpu_custom_call.1} parent=5 // pred_check_branch
        %275 = sbr.rel (%p272) target = $region12
      $region11: #{tpu_custom_call.1} parent=5 // pred_region
        %s276 = ssub.s32 %s21, 1
        // Predicated region
        $region13: #{tpu_custom_call.1} parent=11 // pred_check
          %p277 = pneg %p68
        $region14: #{tpu_custom_call.1} parent=11 // pred_check_branch
          %279 = sbr.rel (%p277) target = $region16
        $region15: #{tpu_custom_call.1} parent=11 // pred_region
          %s281 = ssub.s32 8192, 8192
          %282 = vsyncadd [#allocation6], %s281
          %s283 = sshll.u32 [#allocation5], 4
          %s284 = int_to_ptr.vmem [resolvable:$true] %s283
          %289 = dma.hbm_to_vmem [thread:$0]  %s1, 8192, %s284, [#allocation6], 128, 128, 8
        $region16: #{tpu_custom_call.1} parent=11 // pred_fallthru
          _
        // Predicated region
        $region17: #{tpu_custom_call.1} parent=11 // pred_check
          %p290 = pneg %p89
        $region18: #{tpu_custom_call.1} parent=11 // pred_check_branch
          %292 = sbr.rel (%p290) target = $region20
        $region19: #{tpu_custom_call.1} parent=11 // pred_region
          _
        $region20: #{tpu_custom_call.1} parent=11 // pred_fallthru
          _
        // Predicated region
        $region21: #{tpu_custom_call.1} parent=11 // pred_check
          %p293 = pneg %p110
        $region22: #{tpu_custom_call.1} parent=11 // pred_check_branch
          %295 = sbr.rel (%p293) target = $region24
        $region23: #{tpu_custom_call.1} parent=11 // pred_region
          _
        $region24: #{tpu_custom_call.1} parent=11 // pred_fallthru
          _
        // Predicated region
        $region25: #{tpu_custom_call.1} parent=11 // pred_check
          %p296 = pneg %p131
        $region26: #{tpu_custom_call.1} parent=11 // pred_check_branch
          %298 = sbr.rel (%p296) target = $region28
        $region27: #{tpu_custom_call.1} parent=11 // pred_region
          %s300 = ssub.s32 18432, 18432
          %301 = vsyncadd [#allocation9], %s300
          %s302 = sshll.u32 [#allocation8], 4
          %s303 = int_to_ptr.vmem [resolvable:$true] %s302
          %308 = dma.hbm_to_vmem [thread:$0]  %s4, 18432, %s303, [#allocation9], 128, 128, 8
        $region28: #{tpu_custom_call.1} parent=11 // pred_fallthru
          _
        // Predicated region
        $region29: #{tpu_custom_call.1} parent=11 // pred_check
          %p309 = pneg %p152
        $region30: #{tpu_custom_call.1} parent=11 // pred_check_branch
          %311 = sbr.rel (%p309) target = $region32
        $region31: #{tpu_custom_call.1} parent=11 // pred_region
          _
        $region32: #{tpu_custom_call.1} parent=11 // pred_fallthru
          _
        // Predicated region
        $region33: #{tpu_custom_call.1} parent=11 // pred_check
          %p312 = pneg %p173
        $region34: #{tpu_custom_call.1} parent=11 // pred_check_branch
          %314 = sbr.rel (%p312) target = $region36
        $region35: #{tpu_custom_call.1} parent=11 // pred_region
          _
        $region36: #{tpu_custom_call.1} parent=11 // pred_fallthru
          _
        // Predicated region
        $region37: #{tpu_custom_call.1} parent=11 // pred_check
          %p315 = pneg %p194
        $region38: #{tpu_custom_call.1} parent=11 // pred_check_branch
          %317 = sbr.rel (%p315) target = $region40
        $region39: #{tpu_custom_call.1} parent=11 // pred_region
          _
        $region40: #{tpu_custom_call.1} parent=11 // pred_fallthru
          _
        // Predicated region
        $region41: #{tpu_custom_call.1} parent=11 // pred_check
          %p318 = pneg %p215
        $region42: #{tpu_custom_call.1} parent=11 // pred_check_branch
          %320 = sbr.rel (%p318) target = $region44
        $region43: #{tpu_custom_call.1} parent=11 // pred_region
          _
        $region44: #{tpu_custom_call.1} parent=11 // pred_fallthru
          _
        // Predicated region
        $region45: #{tpu_custom_call.1} parent=11 // pred_check
          %p321 = pneg %p236
        $region46: #{tpu_custom_call.1} parent=11 // pred_check_branch
          %323 = sbr.rel (%p321) target = $region48
        $region47: #{tpu_custom_call.1} parent=11 // pred_region
          _
        $region48: #{tpu_custom_call.1} parent=11 // pred_fallthru
          _
      $region12: #{tpu_custom_call.1} parent=5 // pred_fallthru
        _
      %p324 = scmp.lt.s32.totalorder %s21, 2
      // Predicated region
      $region49: #{tpu_custom_call.1} parent=5 // pred_check
        %p325 = pneg %p324
      $region50: #{tpu_custom_call.1} parent=5 // pred_check_branch
        %327 = sbr.rel (%p325) target = $region52
      $region51: #{tpu_custom_call.1} parent=5 // pred_region
        // Predicated region
        $region53: #{tpu_custom_call.1} parent=51 // pred_check
          %p328 = pneg %p41
        $region54: #{tpu_custom_call.1} parent=51 // pred_check_branch
          %330 = sbr.rel (%p328) target = $region56
        $region55: #{tpu_custom_call.1} parent=51 // pred_region
          %p331 = scmp.lt.s32.totalorder %s21, 1
          %s332 = scalar_select %p331, %s21, 1
          %s333 = smul.addr %s332, 18
          %s334 = smul.addr %s333, 8
          %s335 = scalar_lea.vmem %s0, %s334
        $region56: #{tpu_custom_call.1} parent=51 // pred_fallthru
          _
      $region52: #{tpu_custom_call.1} parent=5 // pred_fallthru
        _
      %p336 = scmp.le.s32.totalorder 1, %s21
      %p337 = scmp.lt.s32.totalorder %s21, 3
      %p338 = pnand %p336, %p337
      %p339 = pneg %p338
      // Predicated region
      $region57: #{tpu_custom_call.1} parent=5 // pred_check
        _
      $region58: #{tpu_custom_call.1} parent=5 // pred_check_branch
        %341 = sbr.rel (%p338) target = $region60
      $region59: #{tpu_custom_call.1} parent=5 // pred_region
        %s342 = ssub.s32 %s21, 1
        // Predicated region
        $region61: #{tpu_custom_call.1} parent=59 // pred_check
          %p343 = pneg %p68
        $region62: #{tpu_custom_call.1} parent=59 // pred_check_branch
          %345 = sbr.rel (%p343) target = $region64
        $region63: #{tpu_custom_call.1} parent=59 // pred_region
          %346 = dma.done [#allocation6], 8192
        $region64: #{tpu_custom_call.1} parent=59 // pred_fallthru
          _
        // Predicated region
        $region65: #{tpu_custom_call.1} parent=59 // pred_check
          %p347 = pneg %p131
        $region66: #{tpu_custom_call.1} parent=59 // pred_check_branch
          %349 = sbr.rel (%p347) target = $region68
        $region67: #{tpu_custom_call.1} parent=59 // pred_region
          %350 = dma.done [#allocation9], 18432
        $region68: #{tpu_custom_call.1} parent=59 // pred_fallthru
          _
        %p351 = scmp.lt.s32.totalorder %s26, 1
        %s352 = scalar_select %p351, %s26, 1
        %s353 = smul.addr %s352, 18
        %s354 = smul.addr %s353, 8
        %s355 = scalar_lea.vmem %s0, %s354
        %p356 = pneg %p47
        %p357 = pneg %p44
        %p358 = pneg %p68
        %p359 = pneg %p65
        %p360 = pneg %p89
        %p361 = pneg %p86
        %p362 = pneg %p110
        %p363 = pneg %p107
        %p364 = pneg %p131
        %p365 = pneg %p128
        %p366 = pneg %p152
        %p367 = pneg %p149
        %p368 = pneg %p173
        %p369 = pneg %p170
        %p370 = pneg %p194
        %p371 = pneg %p191
        %p372 = pneg %p215
        %p373 = pneg %p212
        %p374 = pneg %p236
        %p375 = pneg %p233
        %p376 = pneg %p262
        %p377 = pneg %p259
        %s378 = sand.u32 %s249, 1
        %s379 = scalar_lea.sflag [#allocation7], %s378
        %s380 = sand.u32 %s249, 1
        %s381 = smul.addr %s380, 64
        %s382 = scalar_lea.vmem [#allocation10], %s381
        %p383 = scmp.lt.s32.totalorder %s26, 1
        %s384 = scalar_select %p383, %s26, 1
        %s385 = smul.addr %s384, 18
        %s386 = smul.addr %s385, 8
        %s387 = scalar_lea.vmem %s0, %s386
        %s388 = smul.u32 8, %s26
        %v389 = vld [vmem:[%s387] sm:$0xff]
        %v390 = vld [vmem:[%s387 + $0x10] sm:$0xff]
        %v391 = vld [vmem:[%s387 + $0x20] sm:$0xff]
        %v392 = vld [vmem:[%s387 + $0x30] sm:$0xff]
        %v393 = vld [vmem:[%s387 + $0x40] sm:$0xff]
        %v394 = vld [vmem:[%s387 + $0x50] sm:$0xff]
        %v395 = vld [vmem:[%s387 + $0x60] sm:$0xff]
        %v396 = vld [vmem:[%s387 + $0x70] sm:$0xff]
        %397 = vst [vmem:[#allocation2] sm:$0xff] %v389
        %398 = vst [vmem:[#allocation2 + $0x20] sm:$0xff] %v390
        %399 = vst [vmem:[#allocation2 + $0x40] sm:$0xff] %v391
        %400 = vst [vmem:[#allocation2 + $0x60] sm:$0xff] %v392
        %401 = vst [vmem:[#allocation2 + $0x80] sm:$0xff] %v393
        %402 = vst [vmem:[#allocation2 + $0xa0] sm:$0xff] %v394
        %403 = vst [vmem:[#allocation2 + $0xc0] sm:$0xff] %v395
        %404 = vst [vmem:[#allocation2 + $0xe0] sm:$0xff] %v396
        %v405 = vld [vmem:[%s387 + $0x1] sm:$0xff]
        %v406 = vld [vmem:[%s387 + $0x11] sm:$0xff]
        %v407 = vld [vmem:[%s387 + $0x21] sm:$0xff]
        %v408 = vld [vmem:[%s387 + $0x31] sm:$0xff]
        %v409 = vld [vmem:[%s387 + $0x41] sm:$0xff]
        %v410 = vld [vmem:[%s387 + $0x51] sm:$0xff]
        %v411 = vld [vmem:[%s387 + $0x61] sm:$0xff]
        %v412 = vld [vmem:[%s387 + $0x71] sm:$0xff]
        %413 = vst [vmem:[#allocation2 + $0x8] sm:$0xff] %v405
        %414 = vst [vmem:[#allocation2 + $0x28] sm:$0xff] %v406
        %415 = vst [vmem:[#allocation2 + $0x48] sm:$0xff] %v407
        %416 = vst [vmem:[#allocation2 + $0x68] sm:$0xff] %v408
        %417 = vst [vmem:[#allocation2 + $0x88] sm:$0xff] %v409
        %418 = vst [vmem:[#allocation2 + $0xa8] sm:$0xff] %v410
        %419 = vst [vmem:[#allocation2 + $0xc8] sm:$0xff] %v411
        %420 = vst [vmem:[#allocation2 + $0xe8] sm:$0xff] %v412
        %s421 = scalar_lea.vmem %s387, 16
        %v422 = vld [vmem:[%s421] sm:$0xff]
        %v423 = vld [vmem:[%s421 + $0x10] sm:$0xff]
        %v424 = vld [vmem:[%s421 + $0x20] sm:$0xff]
        %v425 = vld [vmem:[%s421 + $0x30] sm:$0xff]
        %v426 = vld [vmem:[%s421 + $0x40] sm:$0xff]
        %v427 = vld [vmem:[%s421 + $0x50] sm:$0xff]
        %v428 = vld [vmem:[%s421 + $0x60] sm:$0xff]
        %v429 = vld [vmem:[%s421 + $0x70] sm:$0xff]
        %430 = vst [vmem:[#allocation2 + $0x10] sm:$0xff] %v422
        %431 = vst [vmem:[#allocation2 + $0x30] sm:$0xff] %v423
        %432 = vst [vmem:[#allocation2 + $0x50] sm:$0xff] %v424
        %433 = vst [vmem:[#allocation2 + $0x70] sm:$0xff] %v425
        %434 = vst [vmem:[#allocation2 + $0x90] sm:$0xff] %v426
        %435 = vst [vmem:[#allocation2 + $0xb0] sm:$0xff] %v427
        %436 = vst [vmem:[#allocation2 + $0xd0] sm:$0xff] %v428
        %437 = vst [vmem:[#allocation2 + $0xf0] sm:$0xff] %v429
        %v438 = vld [vmem:[%s421 + $0x1] sm:$0xff]
        %v439 = vld [vmem:[%s421 + $0x11] sm:$0xff]
        %v440 = vld [vmem:[%s421 + $0x21] sm:$0xff]
        %v441 = vld [vmem:[%s421 + $0x31] sm:$0xff]
        %v442 = vld [vmem:[%s421 + $0x41] sm:$0xff]
        %v443 = vld [vmem:[%s421 + $0x51] sm:$0xff]
        %v444 = vld [vmem:[%s421 + $0x61] sm:$0xff]
        %v445 = vld [vmem:[%s421 + $0x71] sm:$0xff]
        %446 = vst [vmem:[#allocation2 + $0x18] sm:$0xff] %v438
        %447 = vst [vmem:[#allocation2 + $0x38] sm:$0xff] %v439
        %448 = vst [vmem:[#allocation2 + $0x58] sm:$0xff] %v440
        %449 = vst [vmem:[#allocation2 + $0x78] sm:$0xff] %v441
        %450 = vst [vmem:[#allocation2 + $0x98] sm:$0xff] %v442
        %451 = vst [vmem:[#allocation2 + $0xb8] sm:$0xff] %v443
        %452 = vst [vmem:[#allocation2 + $0xd8] sm:$0xff] %v444
        %453 = vst [vmem:[#allocation2 + $0xf8] sm:$0xff] %v445
        %v454 = vld [vmem:[#allocation2] sm:$0xff]
        %v455 = vld [vmem:[#allocation2 + $0x8] sm:$0xff]
        %v456 = vld [vmem:[#allocation2 + $0x10] sm:$0xff]
        %v457 = vld [vmem:[#allocation2 + $0x18] sm:$0xff]
        %v458 = vld [vmem:[#allocation2 + $0x20] sm:$0xff]
        %v459 = vld [vmem:[#allocation2 + $0x28] sm:$0xff]
        %v460 = vld [vmem:[#allocation2 + $0x30] sm:$0xff]
        %v461 = vld [vmem:[#allocation2 + $0x38] sm:$0xff]
        %v462 = vld [vmem:[#allocation2 + $0x40] sm:$0xff]
        %v463 = vld [vmem:[#allocation2 + $0x48] sm:$0xff]
        %v464 = vld [vmem:[#allocation2 + $0x50] sm:$0xff]
        %v465 = vld [vmem:[#allocation2 + $0x58] sm:$0xff]
        %v466 = vld [vmem:[#allocation2 + $0x60] sm:$0xff]
        %v467 = vld [vmem:[#allocation2 + $0x68] sm:$0xff]
        %v468 = vld [vmem:[#allocation2 + $0x70] sm:$0xff]
        %v469 = vld [vmem:[#allocation2 + $0x78] sm:$0xff]
        %v470 = vld [vmem:[#allocation2 + $0x80] sm:$0xff]
        %v471 = vld [vmem:[#allocation2 + $0x88] sm:$0xff]
        %v472 = vld [vmem:[#allocation2 + $0x90] sm:$0xff]
        %v473 = vld [vmem:[#allocation2 + $0x98] sm:$0xff]
        %v474 = vld [vmem:[#allocation2 + $0xa0] sm:$0xff]
        %v475 = vld [vmem:[#allocation2 + $0xa8] sm:$0xff]
        %v476 = vld [vmem:[#allocation2 + $0xb0] sm:$0xff]
        %v477 = vld [vmem:[#allocation2 + $0xb8] sm:$0xff]
        %v478 = vld [vmem:[#allocation2 + $0xc0] sm:$0xff]
        %v479 = vld [vmem:[#allocation2 + $0xc8] sm:$0xff]
        %v480 = vld [vmem:[#allocation2 + $0xd0] sm:$0xff]
        %v481 = vld [vmem:[#allocation2 + $0xd8] sm:$0xff]
        %v482 = vld [vmem:[#allocation2 + $0xe0] sm:$0xff]
        %v483 = vld [vmem:[#allocation2 + $0xe8] sm:$0xff]
        %v484 = vld [vmem:[#allocation2 + $0xf0] sm:$0xff]
        %v485 = vld [vmem:[#allocation2 + $0xf8] sm:$0xff]
        %v486 = vld [vmem:[#allocation5] sm:$0xff]
        %v487 = vld [vmem:[#allocation5 + $0x8] sm:$0xff]
        %v488 = vld [vmem:[#allocation5 + $0x10] sm:$0xff]
        %v489 = vld [vmem:[#allocation5 + $0x18] sm:$0xff]
        %v490 = vld [vmem:[#allocation5 + $0x20] sm:$0xff]
        %v491 = vld [vmem:[#allocation5 + $0x28] sm:$0xff]
        %v492 = vld [vmem:[#allocation5 + $0x30] sm:$0xff]
        %v493 = vld [vmem:[#allocation5 + $0x38] sm:$0xff]
        %v494 = vld [vmem:[#allocation5 + $0x40] sm:$0xff]
        %v495 = vld [vmem:[#allocation5 + $0x48] sm:$0xff]
        %v496 = vld [vmem:[#allocation5 + $0x50] sm:$0xff]
        %v497 = vld [vmem:[#allocation5 + $0x58] sm:$0xff]
        %v498 = vld [vmem:[#allocation5 + $0x60] sm:$0xff]
        %v499 = vld [vmem:[#allocation5 + $0x68] sm:$0xff]
        %v500 = vld [vmem:[#allocation5 + $0x70] sm:$0xff]
        %v501 = vld [vmem:[#allocation5 + $0x78] sm:$0xff]
        %v502 = vld [vmem:[#allocation5 + $0x80] sm:$0xff]
        %v503 = vld [vmem:[#allocation5 + $0x88] sm:$0xff]
        %v504 = vld [vmem:[#allocation5 + $0x90] sm:$0xff]
        %v505 = vld [vmem:[#allocation5 + $0x98] sm:$0xff]
        %v506 = vld [vmem:[#allocation5 + $0xa0] sm:$0xff]
        %v507 = vld [vmem:[#allocation5 + $0xa8] sm:$0xff]
        %v508 = vld [vmem:[#allocation5 + $0xb0] sm:$0xff]
        %v509 = vld [vmem:[#allocation5 + $0xb8] sm:$0xff]
        %v510 = vld [vmem:[#allocation5 + $0xc0] sm:$0xff]
        %v511 = vld [vmem:[#allocation5 + $0xc8] sm:$0xff]
        %v512 = vld [vmem:[#allocation5 + $0xd0] sm:$0xff]
        %v513 = vld [vmem:[#allocation5 + $0xd8] sm:$0xff]
        %v514 = vld [vmem:[#allocation5 + $0xe0] sm:$0xff]
        %v515 = vld [vmem:[#allocation5 + $0xe8] sm:$0xff]
        %v516 = vld [vmem:[#allocation5 + $0xf0] sm:$0xff]
        %v517 = vld [vmem:[#allocation5 + $0xf8] sm:$0xff]
        %v518 = vld [vmem:[#allocation5 + $0x100] sm:$0xff]
        %v519 = vld [vmem:[#allocation5 + $0x108] sm:$0xff]
        %v520 = vld [vmem:[#allocation5 + $0x110] sm:$0xff]
        %v521 = vld [vmem:[#allocation5 + $0x118] sm:$0xff]
        %v522 = vld [vmem:[#allocation5 + $0x120] sm:$0xff]
        %v523 = vld [vmem:[#allocation5 + $0x128] sm:$0xff]
        %v524 = vld [vmem:[#allocation5 + $0x130] sm:$0xff]
        %v525 = vld [vmem:[#allocation5 + $0x138] sm:$0xff]
        %v526 = vld [vmem:[#allocation5 + $0x140] sm:$0xff]
        %v527 = vld [vmem:[#allocation5 + $0x148] sm:$0xff]
        %v528 = vld [vmem:[#allocation5 + $0x150] sm:$0xff]
        %v529 = vld [vmem:[#allocation5 + $0x158] sm:$0xff]
        %v530 = vld [vmem:[#allocation5 + $0x160] sm:$0xff]
        %v531 = vld [vmem:[#allocation5 + $0x168] sm:$0xff]
        %v532 = vld [vmem:[#allocation5 + $0x170] sm:$0xff]
        %v533 = vld [vmem:[#allocation5 + $0x178] sm:$0xff]
        %v534 = vld [vmem:[#allocation5 + $0x180] sm:$0xff]
        %v535 = vld [vmem:[#allocation5 + $0x188] sm:$0xff]
        %v536 = vld [vmem:[#allocation5 + $0x190] sm:$0xff]
        %v537 = vld [vmem:[#allocation5 + $0x198] sm:$0xff]
        %v538 = vld [vmem:[#allocation5 + $0x1a0] sm:$0xff]
        %v539 = vld [vmem:[#allocation5 + $0x1a8] sm:$0xff]
        %v540 = vld [vmem:[#allocation5 + $0x1b0] sm:$0xff]
        %v541 = vld [vmem:[#allocation5 + $0x1b8] sm:$0xff]
        %v542 = vld [vmem:[#allocation5 + $0x1c0] sm:$0xff]
        %v543 = vld [vmem:[#allocation5 + $0x1c8] sm:$0xff]
        %v544 = vld [vmem:[#allocation5 + $0x1d0] sm:$0xff]
        %v545 = vld [vmem:[#allocation5 + $0x1d8] sm:$0xff]
        %v546 = vld [vmem:[#allocation5 + $0x1e0] sm:$0xff]
        %v547 = vld [vmem:[#allocation5 + $0x1e8] sm:$0xff]
        %v548 = vld [vmem:[#allocation5 + $0x1f0] sm:$0xff]
        %v549 = vld [vmem:[#allocation5 + $0x1f8] sm:$0xff]
        %550 = vmatprep.subr.mxu0 0.0
        %551 = vmatpush1.msra.mxu0 %v486
        %552 = vmatprep.subr.mxu0 0.0
        %553 = vmatpush1.msra.mxu0 %v487
        %554 = vmatprep.subr.mxu0 0.0
        %555 = vmatpush1.msra.mxu0 %v488
        %556 = vmatprep.subr.mxu0 0.0
        %557 = vmatpush1.msra.mxu0 %v489
        %558 = vmatprep.subr.mxu0 0.0
        %559 = vmatpush1.msra.mxu0 %v490
        %560 = vmatprep.subr.mxu0 0.0
        %561 = vmatpush1.msra.mxu0 %v491
        %562 = vmatprep.subr.mxu0 0.0
        %563 = vmatpush1.msra.mxu0 %v492
        %564 = vmatprep.subr.mxu0 0.0
        %565 = vmatpush1.msra.mxu0 %v493
        %566 = vmatprep.subr.mxu0 0.0
        %567 = vmatpush1.msra.mxu0 %v494
        %568 = vmatprep.subr.mxu0 0.0
        %569 = vmatpush1.msra.mxu0 %v495
        %570 = vmatprep.subr.mxu0 0.0
        %571 = vmatpush1.msra.mxu0 %v496
        %572 = vmatprep.subr.mxu0 0.0
        %573 = vmatpush1.msra.mxu0 %v497
        %574 = vmatprep.subr.mxu0 0.0
        %575 = vmatpush1.msra.mxu0 %v498
        %576 = vmatprep.subr.mxu0 0.0
        %577 = vmatpush1.msra.mxu0 %v499
        %578 = vmatprep.subr.mxu0 0.0
        %579 = vmatpush1.msra.mxu0 %v500
        %580 = vmatprep.subr.mxu0 0.0
        %581 = vmatpush1.msra.mxu0 %v501
        %582 = vmatprep.subr.mxu0 0.0
        %583 = vmatpush1.msra.mxu0 %v502
        %584 = vmatprep.subr.mxu0 0.0
        %585 = vmatpush1.msra.mxu0 %v503
        %586 = vmatprep.subr.mxu0 0.0
        %587 = vmatpush1.msra.mxu0 %v504
        %588 = vmatprep.subr.mxu0 0.0
        %589 = vmatpush1.msra.mxu0 %v505
        %590 = vmatprep.subr.mxu0 0.0
        %591 = vmatpush1.msra.mxu0 %v506
        %592 = vmatprep.subr.mxu0 0.0
        %593 = vmatpush1.msra.mxu0 %v507
        %594 = vmatprep.subr.mxu0 0.0
        %595 = vmatpush1.msra.mxu0 %v508
        %596 = vmatprep.subr.mxu0 0.0
        %597 = vmatpush1.msra.mxu0 %v509
        %598 = vmatprep.subr.mxu0 0.0
        %599 = vmatpush1.msra.mxu0 %v510
        %600 = vmatprep.subr.mxu0 0.0
        %601 = vmatpush1.msra.mxu0 %v511
        %602 = vmatprep.subr.mxu0 0.0
        %603 = vmatpush1.msra.mxu0 %v512
        %604 = vmatprep.subr.mxu0 0.0
        %605 = vmatpush1.msra.mxu0 %v513
        %606 = vmatprep.subr.mxu0 0.0
        %607 = vmatpush1.msra.mxu0 %v514
        %608 = vmatprep.subr.mxu0 0.0
        %609 = vmatpush1.msra.mxu0 %v515
        %610 = vmatprep.subr.mxu0 0.0
        %611 = vmatpush1.msra.mxu0 %v516
        %612 = vmatprep.subr.mxu0 0.0
        %613 = vmatpush1.msra.mxu0 %v517
        %614 = vmatprep.mubr.f32.mxu0 %v455
        %615 = vmatmul.mubr.f32.gmra.mrb[0].mxu0 %v454
        %v616 = vpop.f32.mrb[0].mxu0
        %v617 = vadd.f32 0.0, %v616
        %v618 = vpop.f32.mrb[0].mxu0
        %619 = vmatprep.mubr.f32.mxu0 %v459
        %620 = vmatmul.mubr.f32.gmra.mrb[0].mxu0 %v458
        %v621 = vpop.f32.mrb[0].mxu0
        %v622 = vadd.f32 0.0, %v621
        %v623 = vpop.f32.mrb[0].mxu0
        %624 = vmatprep.mubr.f32.mxu0 %v463
        %625 = vmatmul.mubr.f32.gmra.mrb[0].mxu0 %v462
        %v626 = vpop.f32.mrb[0].mxu0
        %v627 = vadd.f32 0.0, %v626
        %v628 = vpop.f32.mrb[0].mxu0
        %629 = vmatprep.mubr.f32.mxu0 %v467
        %630 = vmatmul.mubr.f32.gmra.mrb[0].mxu0 %v466
        %v631 = vpop.f32.mrb[0].mxu0
        %v632 = vadd.f32 0.0, %v631
        %v633 = vpop.f32.mrb[0].mxu0
        %634 = vmatprep.mubr.f32.mxu0 %v471
        %635 = vmatmul.mubr.f32.gmra.mrb[0].mxu0 %v470
        %v636 = vpop.f32.mrb[0].mxu0
        %v637 = vadd.f32 0.0, %v636
        %v638 = vpop.f32.mrb[0].mxu0
        %639 = vmatprep.mubr.f32.mxu0 %v475
        %640 = vmatmul.mubr.f32.gmra.mrb[0].mxu0 %v474
        %v641 = vpop.f32.mrb[0].mxu0
        %v642 = vadd.f32 0.0, %v641
        %v643 = vpop.f32.mrb[0].mxu0
        %644 = vmatprep.mubr.f32.mxu0 %v479
        %645 = vmatmul.mubr.f32.gmra.mrb[0].mxu0 %v478
        %v646 = vpop.f32.mrb[0].mxu0
        %v647 = vadd.f32 0.0, %v646
        %v648 = vpop.f32.mrb[0].mxu0
        %649 = vmatprep.mubr.f32.mxu0 %v483
        %650 = vmatmul.mubr.f32.gmra.mrb[0].mxu0 %v482
        %v651 = vpop.f32.mrb[0].mxu0
        %v652 = vadd.f32 0.0, %v651
        %v653 = vpop.f32.mrb[0].mxu0
        %654 = vdwg.mxu0
        %655 = vmatprep.subr.mxu0 0.0
        %656 = vmatpush1.msra.mxu0 %v518
        %657 = vmatprep.subr.mxu0 0.0
        %658 = vmatpush1.msra.mxu0 %v519
        %659 = vmatprep.subr.mxu0 0.0
        %660 = vmatpush1.msra.mxu0 %v520
        %661 = vmatprep.subr.mxu0 0.0
        %662 = vmatpush1.msra.mxu0 %v521
        %663 = vmatprep.subr.mxu0 0.0
        %664 = vmatpush1.msra.mxu0 %v522
        %665 = vmatprep.subr.mxu0 0.0
        %666 = vmatpush1.msra.mxu0 %v523
        %667 = vmatprep.subr.mxu0 0.0
        %668 = vmatpush1.msra.mxu0 %v524
        %669 = vmatprep.subr.mxu0 0.0
        %670 = vmatpush1.msra.mxu0 %v525
        %671 = vmatprep.subr.mxu0 0.0
        %672 = vmatpush1.msra.mxu0 %v526
        %673 = vmatprep.subr.mxu0 0.0
        %674 = vmatpush1.msra.mxu0 %v527
        %675 = vmatprep.subr.mxu0 0.0
        %676 = vmatpush1.msra.mxu0 %v528
        %677 = vmatprep.subr.mxu0 0.0
        %678 = vmatpush1.msra.mxu0 %v529
        %679 = vmatprep.subr.mxu0 0.0
        %680 = vmatpush1.msra.mxu0 %v530
        %681 = vmatprep.subr.mxu0 0.0
        %682 = vmatpush1.msra.mxu0 %v531
        %683 = vmatprep.subr.mxu0 0.0
        %684 = vmatpush1.msra.mxu0 %v532
        %685 = vmatprep.subr.mxu0 0.0
        %686 = vmatpush1.msra.mxu0 %v533
        %687 = vmatprep.subr.mxu0 0.0
        %688 = vmatpush1.msra.mxu0 %v534
        %689 = vmatprep.subr.mxu0 0.0
        %690 = vmatpush1.msra.mxu0 %v535
        %691 = vmatprep.subr.mxu0 0.0
        %692 = vmatpush1.msra.mxu0 %v536
        %693 = vmatprep.subr.mxu0 0.0
        %694 = vmatpush1.msra.mxu0 %v537
        %695 = vmatprep.subr.mxu0 0.0
        %696 = vmatpush1.msra.mxu0 %v538
        %697 = vmatprep.subr.mxu0 0.0
        %698 = vmatpush1.msra.mxu0 %v539
        %699 = vmatprep.subr.mxu0 0.0
        %700 = vmatpush1.msra.mxu0 %v540
        %701 = vmatprep.subr.mxu0 0.0
        %702 = vmatpush1.msra.mxu0 %v541
        %703 = vmatprep.subr.mxu0 0.0
        %704 = vmatpush1.msra.mxu0 %v542
        %705 = vmatprep.subr.mxu0 0.0
        %706 = vmatpush1.msra.mxu0 %v543
        %707 = vmatprep.subr.mxu0 0.0
        %708 = vmatpush1.msra.mxu0 %v544
        %709 = vmatprep.subr.mxu0 0.0
        %710 = vmatpush1.msra.mxu0 %v545
        %711 = vmatprep.subr.mxu0 0.0
        %712 = vmatpush1.msra.mxu0 %v546
        %713 = vmatprep.subr.mxu0 0.0
        %714 = vmatpush1.msra.mxu0 %v547
        %715 = vmatprep.subr.mxu0 0.0
        %716 = vmatpush1.msra.mxu0 %v548
        %717 = vmatprep.subr.mxu0 0.0
        %718 = vmatpush1.msra.mxu0 %v549
        %719 = vmatprep.mubr.f32.mxu0 %v457
        %720 = vmatmul.mubr.f32.gmra.mrb[0].mxu0 %v456
        %v721 = vpop.f32.mrb[0].mxu0
        %v722 = vadd.f32 %v617, %v721
        %v723 = vpop.f32.mrb[0].mxu0
        %724 = vmatprep.mubr.f32.mxu0 %v461
        %725 = vmatmul.mubr.f32.gmra.mrb[0].mxu0 %v460
        %v726 = vpop.f32.mrb[0].mxu0
        %v727 = vadd.f32 %v622, %v726
        %v728 = vpop.f32.mrb[0].mxu0
        %729 = vmatprep.mubr.f32.mxu0 %v465
        %730 = vmatmul.mubr.f32.gmra.mrb[0].mxu0 %v464
        %v731 = vpop.f32.mrb[0].mxu0
        %v732 = vadd.f32 %v627, %v731
        %v733 = vpop.f32.mrb[0].mxu0
        %734 = vmatprep.mubr.f32.mxu0 %v469
        %735 = vmatmul.mubr.f32.gmra.mrb[0].mxu0 %v468
        %v736 = vpop.f32.mrb[0].mxu0
        %v737 = vadd.f32 %v632, %v736
        %v738 = vpop.f32.mrb[0].mxu0
        %739 = vmatprep.mubr.f32.mxu0 %v473
        %740 = vmatmul.mubr.f32.gmra.mrb[0].mxu0 %v472
        %v741 = vpop.f32.mrb[0].mxu0
        %v742 = vadd.f32 %v637, %v741
        %v743 = vpop.f32.mrb[0].mxu0
        %744 = vmatprep.mubr.f32.mxu0 %v477
        %745 = vmatmul.mubr.f32.gmra.mrb[0].mxu0 %v476
        %v746 = vpop.f32.mrb[0].mxu0
        %v747 = vadd.f32 %v642, %v746
        %v748 = vpop.f32.mrb[0].mxu0
        %749 = vmatprep.mubr.f32.mxu0 %v481
        %750 = vmatmul.mubr.f32.gmra.mrb[0].mxu0 %v480
        %v751 = vpop.f32.mrb[0].mxu0
        %v752 = vadd.f32 %v647, %v751
        %v753 = vpop.f32.mrb[0].mxu0
        %754 = vmatprep.mubr.f32.mxu0 %v485
        %755 = vmatmul.mubr.f32.gmra.mrb[0].mxu0 %v484
        %v756 = vpop.f32.mrb[0].mxu0
        %v757 = vadd.f32 %v652, %v756
        %v758 = vpop.f32.mrb[0].mxu0
        %759 = vdwg.mxu0
        %v760 = vld [vmem:[%s2] sm:$0x1]
        %v762 = vlaneseq
        %v763 = vshrl.u32 %v762, 7
        %v764 = vsub.s32 0, %v763
        %v765 = vrot.slane %v760, %v764
        %v767 = vmul.f32 %v722, %v765
        %v768 = vmul.f32 %v727, %v765
        %v769 = vmul.f32 %v732, %v765
        %v770 = vmul.f32 %v737, %v765
        %v771 = vmul.f32 %v742, %v765
        %v772 = vmul.f32 %v747, %v765
        %v773 = vmul.f32 %v752, %v765
        %v774 = vmul.f32 %v757, %v765
        %v775 = vld [vmem:[%s3] sm:$0x1]
        %v777 = vlaneseq
        %v778 = vshrl.u32 %v777, 7
        %v779 = vsub.s32 0, %v778
        %v780 = vrot.slane %v775, %v779
        %v782 = vadd.f32 %v767, %v780
        %v783 = vadd.f32 %v768, %v780
        %v784 = vadd.f32 %v769, %v780
        %v785 = vadd.f32 %v770, %v780
        %v786 = vadd.f32 %v771, %v780
        %v787 = vadd.f32 %v772, %v780
        %v788 = vadd.f32 %v773, %v780
        %v789 = vadd.f32 %v774, %v780
        %v790 = vmax.f32 %v782, 0.0
        %v791 = vmax.f32 %v783, 0.0
        %v792 = vmax.f32 %v784, 0.0
        %v793 = vmax.f32 %v785, 0.0
        %v794 = vmax.f32 %v786, 0.0
        %v795 = vmax.f32 %v787, 0.0
        %v796 = vmax.f32 %v788, 0.0
        %v797 = vmax.f32 %v789, 0.0
        %798 = vst [vmem:[#allocation3 + $0x7] sm:$0xff] 0.0
        %799 = vst [vmem:[#allocation3 + $0xf] sm:$0x3] 0.0
        %s800 = scalar_lea.vmem [#allocation3], 216
        %801 = vst [vmem:[%s800 + $0x7] sm:$0xff] 0.0
        %802 = vst [vmem:[%s800 + $0xf] sm:$0x3] 0.0
        %803 = vst [vmem:[#allocation3 + $0x7] sm:$0x1] 0.0
        %804 = vst [vmem:[#allocation3 + $0x1f] sm:$0x1] 0.0
        %805 = vst [vmem:[#allocation3 + $0x37] sm:$0x1] 0.0
        %806 = vst [vmem:[#allocation3 + $0x4f] sm:$0x1] 0.0
        %807 = vst [vmem:[#allocation3 + $0x67] sm:$0x1] 0.0
        %808 = vst [vmem:[#allocation3 + $0x7f] sm:$0x1] 0.0
        %809 = vst [vmem:[#allocation3 + $0x97] sm:$0x1] 0.0
        %810 = vst [vmem:[#allocation3 + $0xaf] sm:$0x1] 0.0
        %811 = vst [vmem:[#allocation3 + $0xc7] sm:$0x1] 0.0
        %812 = vst [vmem:[#allocation3 + $0xdf] sm:$0x1] 0.0
        %813 = vst [vmem:[#allocation3 + $0x10] sm:$0x1] 0.0
        %814 = vst [vmem:[#allocation3 + $0x28] sm:$0x1] 0.0
        %815 = vst [vmem:[#allocation3 + $0x40] sm:$0x1] 0.0
        %816 = vst [vmem:[#allocation3 + $0x58] sm:$0x1] 0.0
        %817 = vst [vmem:[#allocation3 + $0x70] sm:$0x1] 0.0
        %818 = vst [vmem:[#allocation3 + $0x88] sm:$0x1] 0.0
        %819 = vst [vmem:[#allocation3 + $0xa0] sm:$0x1] 0.0
        %820 = vst [vmem:[#allocation3 + $0xb8] sm:$0x1] 0.0
        %821 = vst [vmem:[#allocation3 + $0xd0] sm:$0x1] 0.0
        %822 = vst [vmem:[#allocation3 + $0xe8] sm:$0x1] 0.0
        %s823 = scalar_lea.vmem [#allocation3], 24
        %824 = vst [vmem:[%s823 + $0x8] sm:$0xff] %v790
        %825 = vst [vmem:[%s823 + $0x20] sm:$0xff] %v791
        %826 = vst [vmem:[%s823 + $0x38] sm:$0xff] %v792
        %827 = vst [vmem:[%s823 + $0x50] sm:$0xff] %v793
        %828 = vst [vmem:[%s823 + $0x68] sm:$0xff] %v794
        %829 = vst [vmem:[%s823 + $0x80] sm:$0xff] %v795
        %830 = vst [vmem:[%s823 + $0x98] sm:$0xff] %v796
        %831 = vst [vmem:[%s823 + $0xb0] sm:$0xff] %v797
        %v832 = vld [vmem:[#allocation2 + $0x18] sm:$0xff]
        %v833 = vld [vmem:[#allocation2 + $0x38] sm:$0xff]
        %v834 = vld [vmem:[#allocation2 + $0x58] sm:$0xff]
        %v835 = vld [vmem:[#allocation2 + $0x78] sm:$0xff]
        %v836 = vld [vmem:[#allocation2 + $0x98] sm:$0xff]
        %v837 = vld [vmem:[#allocation2 + $0xb8] sm:$0xff]
        %v838 = vld [vmem:[#allocation2 + $0xd8] sm:$0xff]
        %v839 = vld [vmem:[#allocation2 + $0xf8] sm:$0xff]
        %v840 = vld [vmem:[%s7] sm:$0xff]
        %v841 = vld [vmem:[%s7 + $0x8] sm:$0xff]
        %v842 = vld [vmem:[%s7 + $0x10] sm:$0xff]
        %v843 = vld [vmem:[%s7 + $0x18] sm:$0xff]
        %v844 = vld [vmem:[%s7 + $0x20] sm:$0xff]
        %v845 = vld [vmem:[%s7 + $0x28] sm:$0xff]
        %v846 = vld [vmem:[%s7 + $0x30] sm:$0xff]
        %v847 = vld [vmem:[%s7 + $0x38] sm:$0xff]
        %v848 = vld [vmem:[%s7 + $0x40] sm:$0xff]
        %v849 = vld [vmem:[%s7 + $0x48] sm:$0xff]
        %v850 = vld [vmem:[%s7 + $0x50] sm:$0xff]
        %v851 = vld [vmem:[%s7 + $0x58] sm:$0xff]
        %v852 = vld [vmem:[%s7 + $0x60] sm:$0xff]
        %v853 = vld [vmem:[%s7 + $0x68] sm:$0xff]
        %v854 = vld [vmem:[%s7 + $0x70] sm:$0xff]
        %v855 = vld [vmem:[%s7 + $0x78] sm:$0xff]
        %856 = vmatprep.subr.mxu0 0.0
        %857 = vmatpush1.msra.mxu0 %v840
        %858 = vmatprep.subr.mxu0 0.0
        %859 = vmatpush1.msra.mxu0 %v841
        %860 = vmatprep.subr.mxu0 0.0
        %861 = vmatpush1.msra.mxu0 %v842
        %862 = vmatprep.subr.mxu0 0.0
        %863 = vmatpush1.msra.mxu0 %v843
        %864 = vmatprep.subr.mxu0 0.0
        %865 = vmatpush1.msra.mxu0 %v844
        %866 = vmatprep.subr.mxu0 0.0
        %867 = vmatpush1.msra.mxu0 %v845
        %868 = vmatprep.subr.mxu0 0.0
        %869 = vmatpush1.msra.mxu0 %v846
        %870 = vmatprep.subr.mxu0 0.0
        %871 = vmatpush1.msra.mxu0 %v847
        %872 = vmatprep.subr.mxu0 0.0
        %873 = vmatpush1.msra.mxu0 %v848
        %874 = vmatprep.subr.mxu0 0.0
        %875 = vmatpush1.msra.mxu0 %v849
        %876 = vmatprep.subr.mxu0 0.0
        %877 = vmatpush1.msra.mxu0 %v850
        %878 = vmatprep.subr.mxu0 0.0
        %879 = vmatpush1.msra.mxu0 %v851
        %880 = vmatprep.subr.mxu0 0.0
        %881 = vmatpush1.msra.mxu0 %v852
        %882 = vmatprep.subr.mxu0 0.0
        %883 = vmatpush1.msra.mxu0 %v853
        %884 = vmatprep.subr.mxu0 0.0
        %885 = vmatpush1.msra.mxu0 %v854
        %886 = vmatprep.subr.mxu0 0.0
        %887 = vmatpush1.msra.mxu0 %v855
        %888 = vmatprep.subr.mxu0 0.0
        %889 = vmatpush1.msra.mxu0 0.0
        %890 = vmatprep.subr.mxu0 0.0
        %891 = vmatpush1.msra.mxu0 0.0
        %892 = vmatprep.subr.mxu0 0.0
        %893 = vmatpush1.msra.mxu0 0.0
        %894 = vmatprep.subr.mxu0 0.0
        %895 = vmatpush1.msra.mxu0 0.0
        %896 = vmatprep.subr.mxu0 0.0
        %897 = vmatpush1.msra.mxu0 0.0
        %898 = vmatprep.subr.mxu0 0.0
        %899 = vmatpush1.msra.mxu0 0.0
        %900 = vmatprep.subr.mxu0 0.0
        %901 = vmatpush1.msra.mxu0 0.0
        %902 = vmatprep.subr.mxu0 0.0
        %903 = vmatpush1.msra.mxu0 0.0
        %904 = vmatprep.subr.mxu0 0.0
        %905 = vmatpush1.msra.mxu0 0.0
        %906 = vmatprep.subr.mxu0 0.0
        %907 = vmatpush1.msra.mxu0 0.0
        %908 = vmatprep.subr.mxu0 0.0
        %909 = vmatpush1.msra.mxu0 0.0
        %910 = vmatprep.subr.mxu0 0.0
        %911 = vmatpush1.msra.mxu0 0.0
        %912 = vmatprep.subr.mxu0 0.0
        %913 = vmatpush1.msra.mxu0 0.0
        %914 = vmatprep.subr.mxu0 0.0
        %915 = vmatpush1.msra.mxu0 0.0
        %916 = vmatprep.subr.mxu0 0.0
        %917 = vmatpush1.msra.mxu0 0.0
        %918 = vmatprep.subr.mxu0 0.0
        %919 = vmatpush1.msra.mxu0 0.0
        %920 = vmatprep.mubr.f32.mxu0 0.0
        %921 = vmatmul.mubr.f32.gmra.mrb[0].mxu0 %v832
        %v922 = vpop.f32.mrb[0].mxu0
        %v923 = vadd.f32 0.0, %v922
        %v924 = vpop.f32.mrb[0].mxu0
        %925 = vmatprep.mubr.f32.mxu0 0.0
        %926 = vmatmul.mubr.f32.gmra.mrb[0].mxu0 %v833
        %v927 = vpop.f32.mrb[0].mxu0
        %v928 = vadd.f32 0.0, %v927
        %v929 = vpop.f32.mrb[0].mxu0
        %930 = vmatprep.mubr.f32.mxu0 0.0
        %931 = vmatmul.mubr.f32.gmra.mrb[0].mxu0 %v834
        %v932 = vpop.f32.mrb[0].mxu0
        %v933 = vadd.f32 0.0, %v932
        %v934 = vpop.f32.mrb[0].mxu0
        %935 = vmatprep.mubr.f32.mxu0 0.0
        %936 = vmatmul.mubr.f32.gmra.mrb[0].mxu0 %v835
        %v937 = vpop.f32.mrb[0].mxu0
        %v938 = vadd.f32 0.0, %v937
        %v939 = vpop.f32.mrb[0].mxu0
        %940 = vmatprep.mubr.f32.mxu0 0.0
        %941 = vmatmul.mubr.f32.gmra.mrb[0].mxu0 %v836
        %v942 = vpop.f32.mrb[0].mxu0
        %v943 = vadd.f32 0.0, %v942
        %v944 = vpop.f32.mrb[0].mxu0
        %945 = vmatprep.mubr.f32.mxu0 0.0
        %946 = vmatmul.mubr.f32.gmra.mrb[0].mxu0 %v837
        %v947 = vpop.f32.mrb[0].mxu0
        %v948 = vadd.f32 0.0, %v947
        %v949 = vpop.f32.mrb[0].mxu0
        %950 = vmatprep.mubr.f32.mxu0 0.0
        %951 = vmatmul.mubr.f32.gmra.mrb[0].mxu0 %v838
        %v952 = vpop.f32.mrb[0].mxu0
        %v953 = vadd.f32 0.0, %v952
        %v954 = vpop.f32.mrb[0].mxu0
        %955 = vmatprep.mubr.f32.mxu0 0.0
        %956 = vmatmul.mubr.f32.gmra.mrb[0].mxu0 %v839
        %v957 = vpop.f32.mrb[0].mxu0
        %v958 = vadd.f32 0.0, %v957
        %v959 = vpop.f32.mrb[0].mxu0
        %960 = vdwg.mxu0
        %v961 = vld [vmem:[%s8] sm:$0x1]
        %v963 = vlaneseq
        %v964 = vshrl.u32 %v963, 7
        %v965 = vsub.s32 0, %v964
        %v966 = vrot.slane %v961, %v965
        %v968 = vmul.f32 %v923, %v966
        %v969 = vmul.f32 %v928, %v966
        %v970 = vmul.f32 %v933, %v966
        %v971 = vmul.f32 %v938, %v966
        %v972 = vmul.f32 %v943, %v966
        %v973 = vmul.f32 %v948, %v966
        %v974 = vmul.f32 %v953, %v966
        %v975 = vmul.f32 %v958, %v966
        %v976 = vld [vmem:[%s9] sm:$0x1]
        %v978 = vlaneseq
        %v979 = vshrl.u32 %v978, 7
        %v980 = vsub.s32 0, %v979
        %v981 = vrot.slane %v976, %v980
        %v983 = vadd.f32 %v968, %v981
        %v984 = vadd.f32 %v969, %v981
        %v985 = vadd.f32 %v970, %v981
        %v986 = vadd.f32 %v971, %v981
        %v987 = vadd.f32 %v972, %v981
        %v988 = vadd.f32 %v973, %v981
        %v989 = vadd.f32 %v974, %v981
        %v990 = vadd.f32 %v975, %v981
        %v991 = vld [vmem:[#allocation3 + $0x7] sm:$0xff]
        %v992 = vld [vmem:[#allocation3 + $0x1f] sm:$0xff]
        %v993 = vld [vmem:[#allocation3 + $0x37] sm:$0xff]
        %v994 = vld [vmem:[#allocation3 + $0x4f] sm:$0xff]
        %v995 = vld [vmem:[#allocation3 + $0x67] sm:$0xff]
        %v996 = vld [vmem:[#allocation3 + $0x7f] sm:$0xff]
        %v997 = vld [vmem:[#allocation3 + $0x97] sm:$0xff]
        %v998 = vld [vmem:[#allocation3 + $0xaf] sm:$0xff]
        %999 = vst [vmem:[#allocation4] sm:$0xff] %v991
        %1000 = vst [vmem:[#allocation4 + $0x48] sm:$0xff] %v992
        %1001 = vst [vmem:[#allocation4 + $0x90] sm:$0xff] %v993
        %1002 = vst [vmem:[#allocation4 + $0xd8] sm:$0xff] %v994
        %1003 = vst [vmem:[#allocation4 + $0x120] sm:$0xff] %v995
        %1004 = vst [vmem:[#allocation4 + $0x168] sm:$0xff] %v996
        %1005 = vst [vmem:[#allocation4 + $0x1b0] sm:$0xff] %v997
        %1006 = vst [vmem:[#allocation4 + $0x1f8] sm:$0xff] %v998
        %v1007 = vld [vmem:[#allocation3 + $0x8] sm:$0xff]
        %v1008 = vld [vmem:[#allocation3 + $0x20] sm:$0xff]
        %v1009 = vld [vmem:[#allocation3 + $0x38] sm:$0xff]
        %v1010 = vld [vmem:[#allocation3 + $0x50] sm:$0xff]
        %v1011 = vld [vmem:[#allocation3 + $0x68] sm:$0xff]
        %v1012 = vld [vmem:[#allocation3 + $0x80] sm:$0xff]
        %v1013 = vld [vmem:[#allocation3 + $0x98] sm:$0xff]
        %v1014 = vld [vmem:[#allocation3 + $0xb0] sm:$0xff]
        %1015 = vst [vmem:[#allocation4 + $0x8] sm:$0xff] %v1007
        %1016 = vst [vmem:[#allocation4 + $0x50] sm:$0xff] %v1008
        %1017 = vst [vmem:[#allocation4 + $0x98] sm:$0xff] %v1009
        %1018 = vst [vmem:[#allocation4 + $0xe0] sm:$0xff] %v1010
        %1019 = vst [vmem:[#allocation4 + $0x128] sm:$0xff] %v1011
        %1020 = vst [vmem:[#allocation4 + $0x170] sm:$0xff] %v1012
        %1021 = vst [vmem:[#allocation4 + $0x1b8] sm:$0xff] %v1013
        %1022 = vst [vmem:[#allocation4 + $0x200] sm:$0xff] %v1014
        %v1023 = vld [vmem:[#allocation3 + $0x9] sm:$0xff]
        %v1024 = vld [vmem:[#allocation3 + $0x21] sm:$0xff]
        %v1025 = vld [vmem:[#allocation3 + $0x39] sm:$0xff]
        %v1026 = vld [vmem:[#allocation3 + $0x51] sm:$0xff]
        %v1027 = vld [vmem:[#allocation3 + $0x69] sm:$0xff]
        %v1028 = vld [vmem:[#allocation3 + $0x81] sm:$0xff]
        %v1029 = vld [vmem:[#allocation3 + $0x99] sm:$0xff]
        %v1030 = vld [vmem:[#allocation3 + $0xb1] sm:$0xff]
        %1031 = vst [vmem:[#allocation4 + $0x10] sm:$0xff] %v1023
        %1032 = vst [vmem:[#allocation4 + $0x58] sm:$0xff] %v1024
        %1033 = vst [vmem:[#allocation4 + $0xa0] sm:$0xff] %v1025
        %1034 = vst [vmem:[#allocation4 + $0xe8] sm:$0xff] %v1026
        %1035 = vst [vmem:[#allocation4 + $0x130] sm:$0xff] %v1027
        %1036 = vst [vmem:[#allocation4 + $0x178] sm:$0xff] %v1028
        %1037 = vst [vmem:[#allocation4 + $0x1c0] sm:$0xff] %v1029
        %1038 = vst [vmem:[#allocation4 + $0x208] sm:$0xff] %v1030
        %v1039 = vld [vmem:[%s823 + $0x7] sm:$0xff]
        %v1040 = vld [vmem:[%s823 + $0x1f] sm:$0xff]
        %v1041 = vld [vmem:[%s823 + $0x37] sm:$0xff]
        %v1042 = vld [vmem:[%s823 + $0x4f] sm:$0xff]
        %v1043 = vld [vmem:[%s823 + $0x67] sm:$0xff]
        %v1044 = vld [vmem:[%s823 + $0x7f] sm:$0xff]
        %v1045 = vld [vmem:[%s823 + $0x97] sm:$0xff]
        %v1046 = vld [vmem:[%s823 + $0xaf] sm:$0xff]
        %1047 = vst [vmem:[#allocation4 + $0x18] sm:$0xff] %v1039
        %1048 = vst [vmem:[#allocation4 + $0x60] sm:$0xff] %v1040
        %1049 = vst [vmem:[#allocation4 + $0xa8] sm:$0xff] %v1041
        %1050 = vst [vmem:[#allocation4 + $0xf0] sm:$0xff] %v1042
        %1051 = vst [vmem:[#allocation4 + $0x138] sm:$0xff] %v1043
        %1052 = vst [vmem:[#allocation4 + $0x180] sm:$0xff] %v1044
        %1053 = vst [vmem:[#allocation4 + $0x1c8] sm:$0xff] %v1045
        %1054 = vst [vmem:[#allocation4 + $0x210] sm:$0xff] %v1046
        %v1055 = vld [vmem:[%s823 + $0x8] sm:$0xff]
        %v1056 = vld [vmem:[%s823 + $0x20] sm:$0xff]
        %v1057 = vld [vmem:[%s823 + $0x38] sm:$0xff]
        %v1058 = vld [vmem:[%s823 + $0x50] sm:$0xff]
        %v1059 = vld [vmem:[%s823 + $0x68] sm:$0xff]
        %v1060 = vld [vmem:[%s823 + $0x80] sm:$0xff]
        %v1061 = vld [vmem:[%s823 + $0x98] sm:$0xff]
        %v1062 = vld [vmem:[%s823 + $0xb0] sm:$0xff]
        %1063 = vst [vmem:[#allocation4 + $0x20] sm:$0xff] %v1055
        %1064 = vst [vmem:[#allocation4 + $0x68] sm:$0xff] %v1056
        %1065 = vst [vmem:[#allocation4 + $0xb0] sm:$0xff] %v1057
        %1066 = vst [vmem:[#allocation4 + $0xf8] sm:$0xff] %v1058
        %1067 = vst [vmem:[#allocation4 + $0x140] sm:$0xff] %v1059
        %1068 = vst [vmem:[#allocation4 + $0x188] sm:$0xff] %v1060
        %1069 = vst [vmem:[#allocation4 + $0x1d0] sm:$0xff] %v1061
        %1070 = vst [vmem:[#allocation4 + $0x218] sm:$0xff] %v1062
        %v1071 = vld [vmem:[%s823 + $0x9] sm:$0xff]
        %v1072 = vld [vmem:[%s823 + $0x21] sm:$0xff]
        %v1073 = vld [vmem:[%s823 + $0x39] sm:$0xff]
        %v1074 = vld [vmem:[%s823 + $0x51] sm:$0xff]
        %v1075 = vld [vmem:[%s823 + $0x69] sm:$0xff]
        %v1076 = vld [vmem:[%s823 + $0x81] sm:$0xff]
        %v1077 = vld [vmem:[%s823 + $0x99] sm:$0xff]
        %v1078 = vld [vmem:[%s823 + $0xb1] sm:$0xff]
        %1079 = vst [vmem:[#allocation4 + $0x28] sm:$0xff] %v1071
        %1080 = vst [vmem:[#allocation4 + $0x70] sm:$0xff] %v1072
        %1081 = vst [vmem:[#allocation4 + $0xb8] sm:$0xff] %v1073
        %1082 = vst [vmem:[#allocation4 + $0x100] sm:$0xff] %v1074
        %1083 = vst [vmem:[#allocation4 + $0x148] sm:$0xff] %v1075
        %1084 = vst [vmem:[#allocation4 + $0x190] sm:$0xff] %v1076
        %1085 = vst [vmem:[#allocation4 + $0x1d8] sm:$0xff] %v1077
        %1086 = vst [vmem:[#allocation4 + $0x220] sm:$0xff] %v1078
        %s1087 = scalar_lea.vmem [#allocation3], 48
        %v1088 = vld [vmem:[%s1087 + $0x7] sm:$0xff]
        %v1089 = vld [vmem:[%s1087 + $0x1f] sm:$0xff]
        %v1090 = vld [vmem:[%s1087 + $0x37] sm:$0xff]
        %v1091 = vld [vmem:[%s1087 + $0x4f] sm:$0xff]
        %v1092 = vld [vmem:[%s1087 + $0x67] sm:$0xff]
        %v1093 = vld [vmem:[%s1087 + $0x7f] sm:$0xff]
        %v1094 = vld [vmem:[%s1087 + $0x97] sm:$0xff]
        %v1095 = vld [vmem:[%s1087 + $0xaf] sm:$0xff]
        %1096 = vst [vmem:[#allocation4 + $0x30] sm:$0xff] %v1088
        %1097 = vst [vmem:[#allocation4 + $0x78] sm:$0xff] %v1089
        %1098 = vst [vmem:[#allocation4 + $0xc0] sm:$0xff] %v1090
        %1099 = vst [vmem:[#allocation4 + $0x108] sm:$0xff] %v1091
        %1100 = vst [vmem:[#allocation4 + $0x150] sm:$0xff] %v1092
        %1101 = vst [vmem:[#allocation4 + $0x198] sm:$0xff] %v1093
        %1102 = vst [vmem:[#allocation4 + $0x1e0] sm:$0xff] %v1094
        %1103 = vst [vmem:[#allocation4 + $0x228] sm:$0xff] %v1095
        %v1104 = vld [vmem:[%s1087 + $0x8] sm:$0xff]
        %v1105 = vld [vmem:[%s1087 + $0x20] sm:$0xff]
        %v1106 = vld [vmem:[%s1087 + $0x38] sm:$0xff]
        %v1107 = vld [vmem:[%s1087 + $0x50] sm:$0xff]
        %v1108 = vld [vmem:[%s1087 + $0x68] sm:$0xff]
        %v1109 = vld [vmem:[%s1087 + $0x80] sm:$0xff]
        %v1110 = vld [vmem:[%s1087 + $0x98] sm:$0xff]
        %v1111 = vld [vmem:[%s1087 + $0xb0] sm:$0xff]
        %1112 = vst [vmem:[#allocation4 + $0x38] sm:$0xff] %v1104
        %1113 = vst [vmem:[#allocation4 + $0x80] sm:$0xff] %v1105
        %1114 = vst [vmem:[#allocation4 + $0xc8] sm:$0xff] %v1106
        %1115 = vst [vmem:[#allocation4 + $0x110] sm:$0xff] %v1107
        %1116 = vst [vmem:[#allocation4 + $0x158] sm:$0xff] %v1108
        %1117 = vst [vmem:[#allocation4 + $0x1a0] sm:$0xff] %v1109
        %1118 = vst [vmem:[#allocation4 + $0x1e8] sm:$0xff] %v1110
        %1119 = vst [vmem:[#allocation4 + $0x230] sm:$0xff] %v1111
        %v1120 = vld [vmem:[%s1087 + $0x9] sm:$0xff]
        %v1121 = vld [vmem:[%s1087 + $0x21] sm:$0xff]
        %v1122 = vld [vmem:[%s1087 + $0x39] sm:$0xff]
        %v1123 = vld [vmem:[%s1087 + $0x51] sm:$0xff]
        %v1124 = vld [vmem:[%s1087 + $0x69] sm:$0xff]
        %v1125 = vld [vmem:[%s1087 + $0x81] sm:$0xff]
        %v1126 = vld [vmem:[%s1087 + $0x99] sm:$0xff]
        %v1127 = vld [vmem:[%s1087 + $0xb1] sm:$0xff]
        %1128 = vst [vmem:[#allocation4 + $0x40] sm:$0xff] %v1120
        %1129 = vst [vmem:[#allocation4 + $0x88] sm:$0xff] %v1121
        %1130 = vst [vmem:[#allocation4 + $0xd0] sm:$0xff] %v1122
        %1131 = vst [vmem:[#allocation4 + $0x118] sm:$0xff] %v1123
        %1132 = vst [vmem:[#allocation4 + $0x160] sm:$0xff] %v1124
        %1133 = vst [vmem:[#allocation4 + $0x1a8] sm:$0xff] %v1125
        %1134 = vst [vmem:[#allocation4 + $0x1f0] sm:$0xff] %v1126
        %1135 = vst [vmem:[#allocation4 + $0x238] sm:$0xff] %v1127
        %v1136 = vld [vmem:[#allocation4] sm:$0xff]
        %v1137 = vld [vmem:[#allocation4 + $0x8] sm:$0xff]
        %v1138 = vld [vmem:[#allocation4 + $0x10] sm:$0xff]
        %v1139 = vld [vmem:[#allocation4 + $0x18] sm:$0xff]
        %v1140 = vld [vmem:[#allocation4 + $0x20] sm:$0xff]
        %v1141 = vld [vmem:[#allocation4 + $0x28] sm:$0xff]
        %v1142 = vld [vmem:[#allocation4 + $0x30] sm:$0xff]
        %v1143 = vld [vmem:[#allocation4 + $0x38] sm:$0xff]
        %v1144 = vld [vmem:[#allocation4 + $0x40] sm:$0xff]
        %v1145 = vld [vmem:[#allocation4 + $0x48] sm:$0xff]
        %v1146 = vld [vmem:[#allocation4 + $0x50] sm:$0xff]
        %v1147 = vld [vmem:[#allocation4 + $0x58] sm:$0xff]
        %v1148 = vld [vmem:[#allocation4 + $0x60] sm:$0xff]
        %v1149 = vld [vmem:[#allocation4 + $0x68] sm:$0xff]
        %v1150 = vld [vmem:[#allocation4 + $0x70] sm:$0xff]
        %v1151 = vld [vmem:[#allocation4 + $0x78] sm:$0xff]
        %v1152 = vld [vmem:[#allocation4 + $0x80] sm:$0xff]
        %v1153 = vld [vmem:[#allocation4 + $0x88] sm:$0xff]
        %v1154 = vld [vmem:[#allocation4 + $0x90] sm:$0xff]
        %v1155 = vld [vmem:[#allocation4 + $0x98] sm:$0xff]
        %v1156 = vld [vmem:[#allocation4 + $0xa0] sm:$0xff]
        %v1157 = vld [vmem:[#allocation4 + $0xa8] sm:$0xff]
        %v1158 = vld [vmem:[#allocation4 + $0xb0] sm:$0xff]
        %v1159 = vld [vmem:[#allocation4 + $0xb8] sm:$0xff]
        %v1160 = vld [vmem:[#allocation4 + $0xc0] sm:$0xff]
        %v1161 = vld [vmem:[#allocation4 + $0xc8] sm:$0xff]
        %v1162 = vld [vmem:[#allocation4 + $0xd0] sm:$0xff]
        %v1163 = vld [vmem:[#allocation4 + $0xd8] sm:$0xff]
        %v1164 = vld [vmem:[#allocation4 + $0xe0] sm:$0xff]
        %v1165 = vld [vmem:[#allocation4 + $0xe8] sm:$0xff]
        %v1166 = vld [vmem:[#allocation4 + $0xf0] sm:$0xff]
        %v1167 = vld [vmem:[#allocation4 + $0xf8] sm:$0xff]
        %v1168 = vld [vmem:[#allocation4 + $0x100] sm:$0xff]
        %v1169 = vld [vmem:[#allocation4 + $0x108] sm:$0xff]
        %v1170 = vld [vmem:[#allocation4 + $0x110] sm:$0xff]
        %v1171 = vld [vmem:[#allocation4 + $0x118] sm:$0xff]
        %v1172 = vld [vmem:[#allocation4 + $0x120] sm:$0xff]
        %v1173 = vld [vmem:[#allocation4 + $0x128] sm:$0xff]
        %v1174 = vld [vmem:[#allocation4 + $0x130] sm:$0xff]
        %v1175 = vld [vmem:[#allocation4 + $0x138] sm:$0xff]
        %v1176 = vld [vmem:[#allocation4 + $0x140] sm:$0xff]
        %v1177 = vld [vmem:[#allocation4 + $0x148] sm:$0xff]
        %v1178 = vld [vmem:[#allocation4 + $0x150] sm:$0xff]
        %v1179 = vld [vmem:[#allocation4 + $0x158] sm:$0xff]
        %v1180 = vld [vmem:[#allocation4 + $0x160] sm:$0xff]
        %v1181 = vld [vmem:[#allocation4 + $0x168] sm:$0xff]
        %v1182 = vld [vmem:[#allocation4 + $0x170] sm:$0xff]
        %v1183 = vld [vmem:[#allocation4 + $0x178] sm:$0xff]
        %v1184 = vld [vmem:[#allocation4 + $0x180] sm:$0xff]
        %v1185 = vld [vmem:[#allocation4 + $0x188] sm:$0xff]
        %v1186 = vld [vmem:[#allocation4 + $0x190] sm:$0xff]
        %v1187 = vld [vmem:[#allocation4 + $0x198] sm:$0xff]
        %v1188 = vld [vmem:[#allocation4 + $0x1a0] sm:$0xff]
        %v1189 = vld [vmem:[#allocation4 + $0x1a8] sm:$0xff]
        %v1190 = vld [vmem:[#allocation4 + $0x1b0] sm:$0xff]
        %v1191 = vld [vmem:[#allocation4 + $0x1b8] sm:$0xff]
        %v1192 = vld [vmem:[#allocation4 + $0x1c0] sm:$0xff]
        %v1193 = vld [vmem:[#allocation4 + $0x1c8] sm:$0xff]
        %v1194 = vld [vmem:[#allocation4 + $0x1d0] sm:$0xff]
        %v1195 = vld [vmem:[#allocation4 + $0x1d8] sm:$0xff]
        %v1196 = vld [vmem:[#allocation4 + $0x1e0] sm:$0xff]
        %v1197 = vld [vmem:[#allocation4 + $0x1e8] sm:$0xff]
        %v1198 = vld [vmem:[#allocation4 + $0x1f0] sm:$0xff]
        %v1199 = vld [vmem:[#allocation4 + $0x1f8] sm:$0xff]
        %v1200 = vld [vmem:[#allocation4 + $0x200] sm:$0xff]
        %v1201 = vld [vmem:[#allocation4 + $0x208] sm:$0xff]
        %v1202 = vld [vmem:[#allocation4 + $0x210] sm:$0xff]
        %v1203 = vld [vmem:[#allocation4 + $0x218] sm:$0xff]
        %v1204 = vld [vmem:[#allocation4 + $0x220] sm:$0xff]
        %v1205 = vld [vmem:[#allocation4 + $0x228] sm:$0xff]
        %v1206 = vld [vmem:[#allocation4 + $0x230] sm:$0xff]
        %v1207 = vld [vmem:[#allocation4 + $0x238] sm:$0xff]
        %v1208 = vld [vmem:[#allocation8] sm:$0xff]
        %v1209 = vld [vmem:[#allocation8 + $0x8] sm:$0xff]
        %v1210 = vld [vmem:[#allocation8 + $0x10] sm:$0xff]
        %v1211 = vld [vmem:[#allocation8 + $0x18] sm:$0xff]
        %v1212 = vld [vmem:[#allocation8 + $0x20] sm:$0xff]
        %v1213 = vld [vmem:[#allocation8 + $0x28] sm:$0xff]
        %v1214 = vld [vmem:[#allocation8 + $0x30] sm:$0xff]
        %v1215 = vld [vmem:[#allocation8 + $0x38] sm:$0xff]
        %v1216 = vld [vmem:[#allocation8 + $0x40] sm:$0xff]
        %v1217 = vld [vmem:[#allocation8 + $0x48] sm:$0xff]
        %v1218 = vld [vmem:[#allocation8 + $0x50] sm:$0xff]
        %v1219 = vld [vmem:[#allocation8 + $0x58] sm:$0xff]
        %v1220 = vld [vmem:[#allocation8 + $0x60] sm:$0xff]
        %v1221 = vld [vmem:[#allocation8 + $0x68] sm:$0xff]
        %v1222 = vld [vmem:[#allocation8 + $0x70] sm:$0xff]
        %v1223 = vld [vmem:[#allocation8 + $0x78] sm:$0xff]
        %v1224 = vld [vmem:[#allocation8 + $0x80] sm:$0xff]
        %v1225 = vld [vmem:[#allocation8 + $0x88] sm:$0xff]
        %v1226 = vld [vmem:[#allocation8 + $0x90] sm:$0xff]
        %v1227 = vld [vmem:[#allocation8 + $0x98] sm:$0xff]
        %v1228 = vld [vmem:[#allocation8 + $0xa0] sm:$0xff]
        %v1229 = vld [vmem:[#allocation8 + $0xa8] sm:$0xff]
        %v1230 = vld [vmem:[#allocation8 + $0xb0] sm:$0xff]
        %v1231 = vld [vmem:[#allocation8 + $0xb8] sm:$0xff]
        %v1232 = vld [vmem:[#allocation8 + $0xc0] sm:$0xff]
        %v1233 = vld [vmem:[#allocation8 + $0xc8] sm:$0xff]
        %v1234 = vld [vmem:[#allocation8 + $0xd0] sm:$0xff]
        %v1235 = vld [vmem:[#allocation8 + $0xd8] sm:$0xff]
        %v1236 = vld [vmem:[#allocation8 + $0xe0] sm:$0xff]
        %v1237 = vld [vmem:[#allocation8 + $0xe8] sm:$0xff]
        %v1238 = vld [vmem:[#allocation8 + $0xf0] sm:$0xff]
        %v1239 = vld [vmem:[#allocation8 + $0xf8] sm:$0xff]
        %v1240 = vld [vmem:[#allocation8 + $0x100] sm:$0xff]
        %v1241 = vld [vmem:[#allocation8 + $0x108] sm:$0xff]
        %v1242 = vld [vmem:[#allocation8 + $0x110] sm:$0xff]
        %v1243 = vld [vmem:[#allocation8 + $0x118] sm:$0xff]
        %v1244 = vld [vmem:[#allocation8 + $0x120] sm:$0xff]
        %v1245 = vld [vmem:[#allocation8 + $0x128] sm:$0xff]
        %v1246 = vld [vmem:[#allocation8 + $0x130] sm:$0xff]
        %v1247 = vld [vmem:[#allocation8 + $0x138] sm:$0xff]
        %v1248 = vld [vmem:[#allocation8 + $0x140] sm:$0xff]
        %v1249 = vld [vmem:[#allocation8 + $0x148] sm:$0xff]
        %v1250 = vld [vmem:[#allocation8 + $0x150] sm:$0xff]
        %v1251 = vld [vmem:[#allocation8 + $0x158] sm:$0xff]
        %v1252 = vld [vmem:[#allocation8 + $0x160] sm:$0xff]
        %v1253 = vld [vmem:[#allocation8 + $0x168] sm:$0xff]
        %v1254 = vld [vmem:[#allocation8 + $0x170] sm:$0xff]
        %v1255 = vld [vmem:[#allocation8 + $0x178] sm:$0xff]
        %v1256 = vld [vmem:[#allocation8 + $0x180] sm:$0xff]
        %v1257 = vld [vmem:[#allocation8 + $0x188] sm:$0xff]
        %v1258 = vld [vmem:[#allocation8 + $0x190] sm:$0xff]
        %v1259 = vld [vmem:[#allocation8 + $0x198] sm:$0xff]
        %v1260 = vld [vmem:[#allocation8 + $0x1a0] sm:$0xff]
        %v1261 = vld [vmem:[#allocation8 + $0x1a8] sm:$0xff]
        %v1262 = vld [vmem:[#allocation8 + $0x1b0] sm:$0xff]
        %v1263 = vld [vmem:[#allocation8 + $0x1b8] sm:$0xff]
        %v1264 = vld [vmem:[#allocation8 + $0x1c0] sm:$0xff]
        %v1265 = vld [vmem:[#allocation8 + $0x1c8] sm:$0xff]
        %v1266 = vld [vmem:[#allocation8 + $0x1d0] sm:$0xff]
        %v1267 = vld [vmem:[#allocation8 + $0x1d8] sm:$0xff]
        %v1268 = vld [vmem:[#allocation8 + $0x1e0] sm:$0xff]
        %v1269 = vld [vmem:[#allocation8 + $0x1e8] sm:$0xff]
        %v1270 = vld [vmem:[#allocation8 + $0x1f0] sm:$0xff]
        %v1271 = vld [vmem:[#allocation8 + $0x1f8] sm:$0xff]
        %v1272 = vld [vmem:[#allocation8 + $0x200] sm:$0xff]
        %v1273 = vld [vmem:[#allocation8 + $0x208] sm:$0xff]
        %v1274 = vld [vmem:[#allocation8 + $0x210] sm:$0xff]
        %v1275 = vld [vmem:[#allocation8 + $0x218] sm:$0xff]
        %v1276 = vld [vmem:[#allocation8 + $0x220] sm:$0xff]
        %v1277 = vld [vmem:[#allocation8 + $0x228] sm:$0xff]
        %v1278 = vld [vmem:[#allocation8 + $0x230] sm:$0xff]
        %v1279 = vld [vmem:[#allocation8 + $0x238] sm:$0xff]
        %v1280 = vld [vmem:[#allocation8 + $0x240] sm:$0xff]
        %v1281 = vld [vmem:[#allocation8 + $0x248] sm:$0xff]
        %v1282 = vld [vmem:[#allocation8 + $0x250] sm:$0xff]
        %v1283 = vld [vmem:[#allocation8 + $0x258] sm:$0xff]
        %v1284 = vld [vmem:[#allocation8 + $0x260] sm:$0xff]
        %v1285 = vld [vmem:[#allocation8 + $0x268] sm:$0xff]
        %v1286 = vld [vmem:[#allocation8 + $0x270] sm:$0xff]
        %v1287 = vld [vmem:[#allocation8 + $0x278] sm:$0xff]
        %v1288 = vld [vmem:[#allocation8 + $0x280] sm:$0xff]
        %v1289 = vld [vmem:[#allocation8 + $0x288] sm:$0xff]
        %v1290 = vld [vmem:[#allocation8 + $0x290] sm:$0xff]
        %v1291 = vld [vmem:[#allocation8 + $0x298] sm:$0xff]
        %v1292 = vld [vmem:[#allocation8 + $0x2a0] sm:$0xff]
        %v1293 = vld [vmem:[#allocation8 + $0x2a8] sm:$0xff]
        %v1294 = vld [vmem:[#allocation8 + $0x2b0] sm:$0xff]
        %v1295 = vld [vmem:[#allocation8 + $0x2b8] sm:$0xff]
        %v1296 = vld [vmem:[#allocation8 + $0x2c0] sm:$0xff]
        %v1297 = vld [vmem:[#allocation8 + $0x2c8] sm:$0xff]
        %v1298 = vld [vmem:[#allocation8 + $0x2d0] sm:$0xff]
        %v1299 = vld [vmem:[#allocation8 + $0x2d8] sm:$0xff]
        %v1300 = vld [vmem:[#allocation8 + $0x2e0] sm:$0xff]
        %v1301 = vld [vmem:[#allocation8 + $0x2e8] sm:$0xff]
        %v1302 = vld [vmem:[#allocation8 + $0x2f0] sm:$0xff]
        %v1303 = vld [vmem:[#allocation8 + $0x2f8] sm:$0xff]
        %v1304 = vld [vmem:[#allocation8 + $0x300] sm:$0xff]
        %v1305 = vld [vmem:[#allocation8 + $0x308] sm:$0xff]
        %v1306 = vld [vmem:[#allocation8 + $0x310] sm:$0xff]
        %v1307 = vld [vmem:[#allocation8 + $0x318] sm:$0xff]
        %v1308 = vld [vmem:[#allocation8 + $0x320] sm:$0xff]
        %v1309 = vld [vmem:[#allocation8 + $0x328] sm:$0xff]
        %v1310 = vld [vmem:[#allocation8 + $0x330] sm:$0xff]
        %v1311 = vld [vmem:[#allocation8 + $0x338] sm:$0xff]
        %v1312 = vld [vmem:[#allocation8 + $0x340] sm:$0xff]
        %v1313 = vld [vmem:[#allocation8 + $0x348] sm:$0xff]
        %v1314 = vld [vmem:[#allocation8 + $0x350] sm:$0xff]
        %v1315 = vld [vmem:[#allocation8 + $0x358] sm:$0xff]
        %v1316 = vld [vmem:[#allocation8 + $0x360] sm:$0xff]
        %v1317 = vld [vmem:[#allocation8 + $0x368] sm:$0xff]
        %v1318 = vld [vmem:[#allocation8 + $0x370] sm:$0xff]
        %v1319 = vld [vmem:[#allocation8 + $0x378] sm:$0xff]
        %v1320 = vld [vmem:[#allocation8 + $0x380] sm:$0xff]
        %v1321 = vld [vmem:[#allocation8 + $0x388] sm:$0xff]
        %v1322 = vld [vmem:[#allocation8 + $0x390] sm:$0xff]
        %v1323 = vld [vmem:[#allocation8 + $0x398] sm:$0xff]
        %v1324 = vld [vmem:[#allocation8 + $0x3a0] sm:$0xff]
        %v1325 = vld [vmem:[#allocation8 + $0x3a8] sm:$0xff]
        %v1326 = vld [vmem:[#allocation8 + $0x3b0] sm:$0xff]
        %v1327 = vld [vmem:[#allocation8 + $0x3b8] sm:$0xff]
        %v1328 = vld [vmem:[#allocation8 + $0x3c0] sm:$0xff]
        %v1329 = vld [vmem:[#allocation8 + $0x3c8] sm:$0xff]
        %v1330 = vld [vmem:[#allocation8 + $0x3d0] sm:$0xff]
        %v1331 = vld [vmem:[#allocation8 + $0x3d8] sm:$0xff]
        %v1332 = vld [vmem:[#allocation8 + $0x3e0] sm:$0xff]
        %v1333 = vld [vmem:[#allocation8 + $0x3e8] sm:$0xff]
        %v1334 = vld [vmem:[#allocation8 + $0x3f0] sm:$0xff]
        %v1335 = vld [vmem:[#allocation8 + $0x3f8] sm:$0xff]
        %v1336 = vld [vmem:[#allocation8 + $0x400] sm:$0xff]
        %v1337 = vld [vmem:[#allocation8 + $0x408] sm:$0xff]
        %v1338 = vld [vmem:[#allocation8 + $0x410] sm:$0xff]
        %v1339 = vld [vmem:[#allocation8 + $0x418] sm:$0xff]
        %v1340 = vld [vmem:[#allocation8 + $0x420] sm:$0xff]
        %v1341 = vld [vmem:[#allocation8 + $0x428] sm:$0xff]
        %v1342 = vld [vmem:[#allocation8 + $0x430] sm:$0xff]
        %v1343 = vld [vmem:[#allocation8 + $0x438] sm:$0xff]
        %v1344 = vld [vmem:[#allocation8 + $0x440] sm:$0xff]
        %v1345 = vld [vmem:[#allocation8 + $0x448] sm:$0xff]
        %v1346 = vld [vmem:[#allocation8 + $0x450] sm:$0xff]
        %v1347 = vld [vmem:[#allocation8 + $0x458] sm:$0xff]
        %v1348 = vld [vmem:[#allocation8 + $0x460] sm:$0xff]
        %v1349 = vld [vmem:[#allocation8 + $0x468] sm:$0xff]
        %v1350 = vld [vmem:[#allocation8 + $0x470] sm:$0xff]
        %v1351 = vld [vmem:[#allocation8 + $0x478] sm:$0xff]
        %1352 = vmatprep.subr.mxu0 0.0
        %1353 = vmatpush1.msra.mxu0 %v1208
        %1354 = vmatprep.subr.mxu0 0.0
        %1355 = vmatpush1.msra.mxu0 %v1209
        %1356 = vmatprep.subr.mxu0 0.0
        %1357 = vmatpush1.msra.mxu0 %v1210
        %1358 = vmatprep.subr.mxu0 0.0
        %1359 = vmatpush1.msra.mxu0 %v1211
        %1360 = vmatprep.subr.mxu0 0.0
        %1361 = vmatpush1.msra.mxu0 %v1212
        %1362 = vmatprep.subr.mxu0 0.0
        %1363 = vmatpush1.msra.mxu0 %v1213
        %1364 = vmatprep.subr.mxu0 0.0
        %1365 = vmatpush1.msra.mxu0 %v1214
        %1366 = vmatprep.subr.mxu0 0.0
        %1367 = vmatpush1.msra.mxu0 %v1215
        %1368 = vmatprep.subr.mxu0 0.0
        %1369 = vmatpush1.msra.mxu0 %v1216
        %1370 = vmatprep.subr.mxu0 0.0
        %1371 = vmatpush1.msra.mxu0 %v1217
        %1372 = vmatprep.subr.mxu0 0.0
        %1373 = vmatpush1.msra.mxu0 %v1218
        %1374 = vmatprep.subr.mxu0 0.0
        %1375 = vmatpush1.msra.mxu0 %v1219
        %1376 = vmatprep.subr.mxu0 0.0
        %1377 = vmatpush1.msra.mxu0 %v1220
        %1378 = vmatprep.subr.mxu0 0.0
        %1379 = vmatpush1.msra.mxu0 %v1221
        %1380 = vmatprep.subr.mxu0 0.0
        %1381 = vmatpush1.msra.mxu0 %v1222
        %1382 = vmatprep.subr.mxu0 0.0
        %1383 = vmatpush1.msra.mxu0 %v1223
        %1384 = vmatprep.subr.mxu0 0.0
        %1385 = vmatpush1.msra.mxu0 %v1224
        %1386 = vmatprep.subr.mxu0 0.0
        %1387 = vmatpush1.msra.mxu0 %v1225
        %1388 = vmatprep.subr.mxu0 0.0
        %1389 = vmatpush1.msra.mxu0 %v1226
        %1390 = vmatprep.subr.mxu0 0.0
        %1391 = vmatpush1.msra.mxu0 %v1227
        %1392 = vmatprep.subr.mxu0 0.0
        %1393 = vmatpush1.msra.mxu0 %v1228
        %1394 = vmatprep.subr.mxu0 0.0
        %1395 = vmatpush1.msra.mxu0 %v1229
        %1396 = vmatprep.subr.mxu0 0.0
        %1397 = vmatpush1.msra.mxu0 %v1230
        %1398 = vmatprep.subr.mxu0 0.0
        %1399 = vmatpush1.msra.mxu0 %v1231
        %1400 = vmatprep.subr.mxu0 0.0
        %1401 = vmatpush1.msra.mxu0 %v1232
        %1402 = vmatprep.subr.mxu0 0.0
        %1403 = vmatpush1.msra.mxu0 %v1233
        %1404 = vmatprep.subr.mxu0 0.0
        %1405 = vmatpush1.msra.mxu0 %v1234
        %1406 = vmatprep.subr.mxu0 0.0
        %1407 = vmatpush1.msra.mxu0 %v1235
        %1408 = vmatprep.subr.mxu0 0.0
        %1409 = vmatpush1.msra.mxu0 %v1236
        %1410 = vmatprep.subr.mxu0 0.0
        %1411 = vmatpush1.msra.mxu0 %v1237
        %1412 = vmatprep.subr.mxu0 0.0
        %1413 = vmatpush1.msra.mxu0 %v1238
        %1414 = vmatprep.subr.mxu0 0.0
        %1415 = vmatpush1.msra.mxu0 %v1239
        %1416 = vmatprep.mubr.f32.mxu0 %v1137
        %1417 = vmatmul.mubr.f32.gmra.mrb[0].mxu0 %v1136
        %v1418 = vpop.f32.mrb[0].mxu0
        %v1419 = vadd.f32 0.0, %v1418
        %v1420 = vpop.f32.mrb[0].mxu0
        %1421 = vmatprep.mubr.f32.mxu0 %v1146
        %1422 = vmatmul.mubr.f32.gmra.mrb[0].mxu0 %v1145
        %v1423 = vpop.f32.mrb[0].mxu0
        %v1424 = vadd.f32 0.0, %v1423
        %v1425 = vpop.f32.mrb[0].mxu0
        %1426 = vmatprep.mubr.f32.mxu0 %v1155
        %1427 = vmatmul.mubr.f32.gmra.mrb[0].mxu0 %v1154
        %v1428 = vpop.f32.mrb[0].mxu0
        %v1429 = vadd.f32 0.0, %v1428
        %v1430 = vpop.f32.mrb[0].mxu0
        %1431 = vmatprep.mubr.f32.mxu0 %v1164
        %1432 = vmatmul.mubr.f32.gmra.mrb[0].mxu0 %v1163
        %v1433 = vpop.f32.mrb[0].mxu0
        %v1434 = vadd.f32 0.0, %v1433
        %v1435 = vpop.f32.mrb[0].mxu0
        %1436 = vmatprep.mubr.f32.mxu0 %v1173
        %1437 = vmatmul.mubr.f32.gmra.mrb[0].mxu0 %v1172
        %v1438 = vpop.f32.mrb[0].mxu0
        %v1439 = vadd.f32 0.0, %v1438
        %v1440 = vpop.f32.mrb[0].mxu0
        %1441 = vmatprep.mubr.f32.mxu0 %v1182
        %1442 = vmatmul.mubr.f32.gmra.mrb[0].mxu0 %v1181
        %v1443 = vpop.f32.mrb[0].mxu0
        %v1444 = vadd.f32 0.0, %v1443
        %v1445 = vpop.f32.mrb[0].mxu0
        %1446 = vmatprep.mubr.f32.mxu0 %v1191
        %1447 = vmatmul.mubr.f32.gmra.mrb[0].mxu0 %v1190
        %v1448 = vpop.f32.mrb[0].mxu0
        %v1449 = vadd.f32 0.0, %v1448
        %v1450 = vpop.f32.mrb[0].mxu0
        %1451 = vmatprep.mubr.f32.mxu0 %v1200
        %1452 = vmatmul.mubr.f32.gmra.mrb[0].mxu0 %v1199
        %v1453 = vpop.f32.mrb[0].mxu0
        %v1454 = vadd.f32 0.0, %v1453
        %v1455 = vpop.f32.mrb[0].mxu0
        %1456 = vdwg.mxu0
        %1457 = vmatprep.subr.mxu0 0.0
        %1458 = vmatpush1.msra.mxu0 %v1240
        %1459 = vmatprep.subr.mxu0 0.0
        %1460 = vmatpush1.msra.mxu0 %v1241
        %1461 = vmatprep.subr.mxu0 0.0
        %1462 = vmatpush1.msra.mxu0 %v1242
        %1463 = vmatprep.subr.mxu0 0.0
        %1464 = vmatpush1.msra.mxu0 %v1243
        %1465 = vmatprep.subr.mxu0 0.0
        %1466 = vmatpush1.msra.mxu0 %v1244
        %1467 = vmatprep.subr.mxu0 0.0
        %1468 = vmatpush1.msra.mxu0 %v1245
        %1469 = vmatprep.subr.mxu0 0.0
        %1470 = vmatpush1.msra.mxu0 %v1246
        %1471 = vmatprep.subr.mxu0 0.0
        %1472 = vmatpush1.msra.mxu0 %v1247
        %1473 = vmatprep.subr.mxu0 0.0
        %1474 = vmatpush1.msra.mxu0 %v1248
        %1475 = vmatprep.subr.mxu0 0.0
        %1476 = vmatpush1.msra.mxu0 %v1249
        %1477 = vmatprep.subr.mxu0 0.0
        %1478 = vmatpush1.msra.mxu0 %v1250
        %1479 = vmatprep.subr.mxu0 0.0
        %1480 = vmatpush1.msra.mxu0 %v1251
        %1481 = vmatprep.subr.mxu0 0.0
        %1482 = vmatpush1.msra.mxu0 %v1252
        %1483 = vmatprep.subr.mxu0 0.0
        %1484 = vmatpush1.msra.mxu0 %v1253
        %1485 = vmatprep.subr.mxu0 0.0
        %1486 = vmatpush1.msra.mxu0 %v1254
        %1487 = vmatprep.subr.mxu0 0.0
        %1488 = vmatpush1.msra.mxu0 %v1255
        %1489 = vmatprep.subr.mxu0 0.0
        %1490 = vmatpush1.msra.mxu0 %v1256
        %1491 = vmatprep.subr.mxu0 0.0
        %1492 = vmatpush1.msra.mxu0 %v1257
        %1493 = vmatprep.subr.mxu0 0.0
        %1494 = vmatpush1.msra.mxu0 %v1258
        %1495 = vmatprep.subr.mxu0 0.0
        %1496 = vmatpush1.msra.mxu0 %v1259
        %1497 = vmatprep.subr.mxu0 0.0
        %1498 = vmatpush1.msra.mxu0 %v1260
        %1499 = vmatprep.subr.mxu0 0.0
        %1500 = vmatpush1.msra.mxu0 %v1261
        %1501 = vmatprep.subr.mxu0 0.0
        %1502 = vmatpush1.msra.mxu0 %v1262
        %1503 = vmatprep.subr.mxu0 0.0
        %1504 = vmatpush1.msra.mxu0 %v1263
        %1505 = vmatprep.subr.mxu0 0.0
        %1506 = vmatpush1.msra.mxu0 %v1264
        %1507 = vmatprep.subr.mxu0 0.0
        %1508 = vmatpush1.msra.mxu0 %v1265
        %1509 = vmatprep.subr.mxu0 0.0
        %1510 = vmatpush1.msra.mxu0 %v1266
        %1511 = vmatprep.subr.mxu0 0.0
        %1512 = vmatpush1.msra.mxu0 %v1267
        %1513 = vmatprep.subr.mxu0 0.0
        %1514 = vmatpush1.msra.mxu0 %v1268
        %1515 = vmatprep.subr.mxu0 0.0
        %1516 = vmatpush1.msra.mxu0 %v1269
        %1517 = vmatprep.subr.mxu0 0.0
        %1518 = vmatpush1.msra.mxu0 %v1270
        %1519 = vmatprep.subr.mxu0 0.0
        %1520 = vmatpush1.msra.mxu0 %v1271
        %1521 = vmatprep.mubr.f32.mxu0 %v1139
        %1522 = vmatmul.mubr.f32.gmra.mrb[0].mxu0 %v1138
        %v1523 = vpop.f32.mrb[0].mxu0
        %v1524 = vadd.f32 %v1419, %v1523
        %v1525 = vpop.f32.mrb[0].mxu0
        %1526 = vmatprep.mubr.f32.mxu0 %v1148
        %1527 = vmatmul.mubr.f32.gmra.mrb[0].mxu0 %v1147
        %v1528 = vpop.f32.mrb[0].mxu0
        %v1529 = vadd.f32 %v1424, %v1528
        %v1530 = vpop.f32.mrb[0].mxu0
        %1531 = vmatprep.mubr.f32.mxu0 %v1157
        %1532 = vmatmul.mubr.f32.gmra.mrb[0].mxu0 %v1156
        %v1533 = vpop.f32.mrb[0].mxu0
        %v1534 = vadd.f32 %v1429, %v1533
        %v1535 = vpop.f32.mrb[0].mxu0
        %1536 = vmatprep.mubr.f32.mxu0 %v1166
        %1537 = vmatmul.mubr.f32.gmra.mrb[0].mxu0 %v1165
        %v1538 = vpop.f32.mrb[0].mxu0
        %v1539 = vadd.f32 %v1434, %v1538
        %v1540 = vpop.f32.mrb[0].mxu0
        %1541 = vmatprep.mubr.f32.mxu0 %v1175
        %1542 = vmatmul.mubr.f32.gmra.mrb[0].mxu0 %v1174
        %v1543 = vpop.f32.mrb[0].mxu0
        %v1544 = vadd.f32 %v1439, %v1543
        %v1545 = vpop.f32.mrb[0].mxu0
        %1546 = vmatprep.mubr.f32.mxu0 %v1184
        %1547 = vmatmul.mubr.f32.gmra.mrb[0].mxu0 %v1183
        %v1548 = vpop.f32.mrb[0].mxu0
        %v1549 = vadd.f32 %v1444, %v1548
        %v1550 = vpop.f32.mrb[0].mxu0
        %1551 = vmatprep.mubr.f32.mxu0 %v1193
        %1552 = vmatmul.mubr.f32.gmra.mrb[0].mxu0 %v1192
        %v1553 = vpop.f32.mrb[0].mxu0
        %v1554 = vadd.f32 %v1449, %v1553
        %v1555 = vpop.f32.mrb[0].mxu0
        %1556 = vmatprep.mubr.f32.mxu0 %v1202
        %1557 = vmatmul.mubr.f32.gmra.mrb[0].mxu0 %v1201
        %v1558 = vpop.f32.mrb[0].mxu0
        %v1559 = vadd.f32 %v1454, %v1558
        %v1560 = vpop.f32.mrb[0].mxu0
        %1561 = vdwg.mxu0
        %1562 = vmatprep.subr.mxu0 0.0
        %1563 = vmatpush1.msra.mxu0 %v1272
        %1564 = vmatprep.subr.mxu0 0.0
        %1565 = vmatpush1.msra.mxu0 %v1273
        %1566 = vmatprep.subr.mxu0 0.0
        %1567 = vmatpush1.msra.mxu0 %v1274
        %1568 = vmatprep.subr.mxu0 0.0
        %1569 = vmatpush1.msra.mxu0 %v1275
        %1570 = vmatprep.subr.mxu0 0.0
        %1571 = vmatpush1.msra.mxu0 %v1276
        %1572 = vmatprep.subr.mxu0 0.0
        %1573 = vmatpush1.msra.mxu0 %v1277
        %1574 = vmatprep.subr.mxu0 0.0
        %1575 = vmatpush1.msra.mxu0 %v1278
        %1576 = vmatprep.subr.mxu0 0.0
        %1577 = vmatpush1.msra.mxu0 %v1279
        %1578 = vmatprep.subr.mxu0 0.0
        %1579 = vmatpush1.msra.mxu0 %v1280
        %1580 = vmatprep.subr.mxu0 0.0
        %1581 = vmatpush1.msra.mxu0 %v1281
        %1582 = vmatprep.subr.mxu0 0.0
        %1583 = vmatpush1.msra.mxu0 %v1282
        %1584 = vmatprep.subr.mxu0 0.0
        %1585 = vmatpush1.msra.mxu0 %v1283
        %1586 = vmatprep.subr.mxu0 0.0
        %1587 = vmatpush1.msra.mxu0 %v1284
        %1588 = vmatprep.subr.mxu0 0.0
        %1589 = vmatpush1.msra.mxu0 %v1285
        %1590 = vmatprep.subr.mxu0 0.0
        %1591 = vmatpush1.msra.mxu0 %v1286
        %1592 = vmatprep.subr.mxu0 0.0
        %1593 = vmatpush1.msra.mxu0 %v1287
        %1594 = vmatprep.subr.mxu0 0.0
        %1595 = vmatpush1.msra.mxu0 %v1288
        %1596 = vmatprep.subr.mxu0 0.0
        %1597 = vmatpush1.msra.mxu0 %v1289
        %1598 = vmatprep.subr.mxu0 0.0
        %1599 = vmatpush1.msra.mxu0 %v1290
        %1600 = vmatprep.subr.mxu0 0.0
        %1601 = vmatpush1.msra.mxu0 %v1291
        %1602 = vmatprep.subr.mxu0 0.0
        %1603 = vmatpush1.msra.mxu0 %v1292
        %1604 = vmatprep.subr.mxu0 0.0
        %1605 = vmatpush1.msra.mxu0 %v1293
        %1606 = vmatprep.subr.mxu0 0.0
        %1607 = vmatpush1.msra.mxu0 %v1294
        %1608 = vmatprep.subr.mxu0 0.0
        %1609 = vmatpush1.msra.mxu0 %v1295
        %1610 = vmatprep.subr.mxu0 0.0
        %1611 = vmatpush1.msra.mxu0 %v1296
        %1612 = vmatprep.subr.mxu0 0.0
        %1613 = vmatpush1.msra.mxu0 %v1297
        %1614 = vmatprep.subr.mxu0 0.0
        %1615 = vmatpush1.msra.mxu0 %v1298
        %1616 = vmatprep.subr.mxu0 0.0
        %1617 = vmatpush1.msra.mxu0 %v1299
        %1618 = vmatprep.subr.mxu0 0.0
        %1619 = vmatpush1.msra.mxu0 %v1300
        %1620 = vmatprep.subr.mxu0 0.0
        %1621 = vmatpush1.msra.mxu0 %v1301
        %1622 = vmatprep.subr.mxu0 0.0
        %1623 = vmatpush1.msra.mxu0 %v1302
        %1624 = vmatprep.subr.mxu0 0.0
        %1625 = vmatpush1.msra.mxu0 %v1303
        %1626 = vmatprep.mubr.f32.mxu0 %v1141
        %1627 = vmatmul.mubr.f32.gmra.mrb[0].mxu0 %v1140
        %v1628 = vpop.f32.mrb[0].mxu0
        %v1629 = vadd.f32 %v1524, %v1628
        %v1630 = vpop.f32.mrb[0].mxu0
        %1631 = vmatprep.mubr.f32.mxu0 %v1150
        %1632 = vmatmul.mubr.f32.gmra.mrb[0].mxu0 %v1149
        %v1633 = vpop.f32.mrb[0].mxu0
        %v1634 = vadd.f32 %v1529, %v1633
        %v1635 = vpop.f32.mrb[0].mxu0
        %1636 = vmatprep.mubr.f32.mxu0 %v1159
        %1637 = vmatmul.mubr.f32.gmra.mrb[0].mxu0 %v1158
        %v1638 = vpop.f32.mrb[0].mxu0
        %v1639 = vadd.f32 %v1534, %v1638
        %v1640 = vpop.f32.mrb[0].mxu0
        %1641 = vmatprep.mubr.f32.mxu0 %v1168
        %1642 = vmatmul.mubr.f32.gmra.mrb[0].mxu0 %v1167
        %v1643 = vpop.f32.mrb[0].mxu0
        %v1644 = vadd.f32 %v1539, %v1643
        %v1645 = vpop.f32.mrb[0].mxu0
        %1646 = vmatprep.mubr.f32.mxu0 %v1177
        %1647 = vmatmul.mubr.f32.gmra.mrb[0].mxu0 %v1176
        %v1648 = vpop.f32.mrb[0].mxu0
        %v1649 = vadd.f32 %v1544, %v1648
        %v1650 = vpop.f32.mrb[0].mxu0
        %1651 = vmatprep.mubr.f32.mxu0 %v1186
        %1652 = vmatmul.mubr.f32.gmra.mrb[0].mxu0 %v1185
        %v1653 = vpop.f32.mrb[0].mxu0
        %v1654 = vadd.f32 %v1549, %v1653
        %v1655 = vpop.f32.mrb[0].mxu0
        %1656 = vmatprep.mubr.f32.mxu0 %v1195
        %1657 = vmatmul.mubr.f32.gmra.mrb[0].mxu0 %v1194
        %v1658 = vpop.f32.mrb[0].mxu0
        %v1659 = vadd.f32 %v1554, %v1658
        %v1660 = vpop.f32.mrb[0].mxu0
        %1661 = vmatprep.mubr.f32.mxu0 %v1204
        %1662 = vmatmul.mubr.f32.gmra.mrb[0].mxu0 %v1203
        %v1663 = vpop.f32.mrb[0].mxu0
        %v1664 = vadd.f32 %v1559, %v1663
        %v1665 = vpop.f32.mrb[0].mxu0
        %1666 = vdwg.mxu0
        %1667 = vmatprep.subr.mxu0 0.0
        %1668 = vmatpush1.msra.mxu0 %v1304
        %1669 = vmatprep.subr.mxu0 0.0
        %1670 = vmatpush1.msra.mxu0 %v1305
        %1671 = vmatprep.subr.mxu0 0.0
        %1672 = vmatpush1.msra.mxu0 %v1306
        %1673 = vmatprep.subr.mxu0 0.0
        %1674 = vmatpush1.msra.mxu0 %v1307
        %1675 = vmatprep.subr.mxu0 0.0
        %1676 = vmatpush1.msra.mxu0 %v1308
        %1677 = vmatprep.subr.mxu0 0.0
        %1678 = vmatpush1.msra.mxu0 %v1309
        %1679 = vmatprep.subr.mxu0 0.0
        %1680 = vmatpush1.msra.mxu0 %v1310
        %1681 = vmatprep.subr.mxu0 0.0
        %1682 = vmatpush1.msra.mxu0 %v1311
        %1683 = vmatprep.subr.mxu0 0.0
        %1684 = vmatpush1.msra.mxu0 %v1312
        %1685 = vmatprep.subr.mxu0 0.0
        %1686 = vmatpush1.msra.mxu0 %v1313
        %1687 = vmatprep.subr.mxu0 0.0
        %1688 = vmatpush1.msra.mxu0 %v1314
        %1689 = vmatprep.subr.mxu0 0.0
        %1690 = vmatpush1.msra.mxu0 %v1315
        %1691 = vmatprep.subr.mxu0 0.0
        %1692 = vmatpush1.msra.mxu0 %v1316
        %1693 = vmatprep.subr.mxu0 0.0
        %1694 = vmatpush1.msra.mxu0 %v1317
        %1695 = vmatprep.subr.mxu0 0.0
        %1696 = vmatpush1.msra.mxu0 %v1318
        %1697 = vmatprep.subr.mxu0 0.0
        %1698 = vmatpush1.msra.mxu0 %v1319
        %1699 = vmatprep.subr.mxu0 0.0
        %1700 = vmatpush1.msra.mxu0 %v1320
        %1701 = vmatprep.subr.mxu0 0.0
        %1702 = vmatpush1.msra.mxu0 %v1321
        %1703 = vmatprep.subr.mxu0 0.0
        %1704 = vmatpush1.msra.mxu0 %v1322
        %1705 = vmatprep.subr.mxu0 0.0
        %1706 = vmatpush1.msra.mxu0 %v1323
        %1707 = vmatprep.subr.mxu0 0.0
        %1708 = vmatpush1.msra.mxu0 %v1324
        %1709 = vmatprep.subr.mxu0 0.0
        %1710 = vmatpush1.msra.mxu0 %v1325
        %1711 = vmatprep.subr.mxu0 0.0
        %1712 = vmatpush1.msra.mxu0 %v1326
        %1713 = vmatprep.subr.mxu0 0.0
        %1714 = vmatpush1.msra.mxu0 %v1327
        %1715 = vmatprep.subr.mxu0 0.0
        %1716 = vmatpush1.msra.mxu0 %v1328
        %1717 = vmatprep.subr.mxu0 0.0
        %1718 = vmatpush1.msra.mxu0 %v1329
        %1719 = vmatprep.subr.mxu0 0.0
        %1720 = vmatpush1.msra.mxu0 %v1330
        %1721 = vmatprep.subr.mxu0 0.0
        %1722 = vmatpush1.msra.mxu0 %v1331
        %1723 = vmatprep.subr.mxu0 0.0
        %1724 = vmatpush1.msra.mxu0 %v1332
        %1725 = vmatprep.subr.mxu0 0.0
        %1726 = vmatpush1.msra.mxu0 %v1333
        %1727 = vmatprep.subr.mxu0 0.0
        %1728 = vmatpush1.msra.mxu0 %v1334
        %1729 = vmatprep.subr.mxu0 0.0
        %1730 = vmatpush1.msra.mxu0 %v1335
        %1731 = vmatprep.mubr.f32.mxu0 %v1143
        %1732 = vmatmul.mubr.f32.gmra.mrb[0].mxu0 %v1142
        %v1733 = vpop.f32.mrb[0].mxu0
        %v1734 = vadd.f32 %v1629, %v1733
        %v1735 = vpop.f32.mrb[0].mxu0
        %1736 = vmatprep.mubr.f32.mxu0 %v1152
        %1737 = vmatmul.mubr.f32.gmra.mrb[0].mxu0 %v1151
        %v1738 = vpop.f32.mrb[0].mxu0
        %v1739 = vadd.f32 %v1634, %v1738
        %v1740 = vpop.f32.mrb[0].mxu0
        %1741 = vmatprep.mubr.f32.mxu0 %v1161
        %1742 = vmatmul.mubr.f32.gmra.mrb[0].mxu0 %v1160
        %v1743 = vpop.f32.mrb[0].mxu0
        %v1744 = vadd.f32 %v1639, %v1743
        %v1745 = vpop.f32.mrb[0].mxu0
        %1746 = vmatprep.mubr.f32.mxu0 %v1170
        %1747 = vmatmul.mubr.f32.gmra.mrb[0].mxu0 %v1169
        %v1748 = vpop.f32.mrb[0].mxu0
        %v1749 = vadd.f32 %v1644, %v1748
        %v1750 = vpop.f32.mrb[0].mxu0
        %1751 = vmatprep.mubr.f32.mxu0 %v1179
        %1752 = vmatmul.mubr.f32.gmra.mrb[0].mxu0 %v1178
        %v1753 = vpop.f32.mrb[0].mxu0
        %v1754 = vadd.f32 %v1649, %v1753
        %v1755 = vpop.f32.mrb[0].mxu0
        %1756 = vmatprep.mubr.f32.mxu0 %v1188
        %1757 = vmatmul.mubr.f32.gmra.mrb[0].mxu0 %v1187
        %v1758 = vpop.f32.mrb[0].mxu0
        %v1759 = vadd.f32 %v1654, %v1758
        %v1760 = vpop.f32.mrb[0].mxu0
        %1761 = vmatprep.mubr.f32.mxu0 %v1197
        %1762 = vmatmul.mubr.f32.gmra.mrb[0].mxu0 %v1196
        %v1763 = vpop.f32.mrb[0].mxu0
        %v1764 = vadd.f32 %v1659, %v1763
        %v1765 = vpop.f32.mrb[0].mxu0
        %1766 = vmatprep.mubr.f32.mxu0 %v1206
        %1767 = vmatmul.mubr.f32.gmra.mrb[0].mxu0 %v1205
        %v1768 = vpop.f32.mrb[0].mxu0
        %v1769 = vadd.f32 %v1664, %v1768
        %v1770 = vpop.f32.mrb[0].mxu0
        %1771 = vdwg.mxu0
        %1772 = vmatprep.subr.mxu0 0.0
        %1773 = vmatpush1.msra.mxu0 %v1336
        %1774 = vmatprep.subr.mxu0 0.0
        %1775 = vmatpush1.msra.mxu0 %v1337
        %1776 = vmatprep.subr.mxu0 0.0
        %1777 = vmatpush1.msra.mxu0 %v1338
        %1778 = vmatprep.subr.mxu0 0.0
        %1779 = vmatpush1.msra.mxu0 %v1339
        %1780 = vmatprep.subr.mxu0 0.0
        %1781 = vmatpush1.msra.mxu0 %v1340
        %1782 = vmatprep.subr.mxu0 0.0
        %1783 = vmatpush1.msra.mxu0 %v1341
        %1784 = vmatprep.subr.mxu0 0.0
        %1785 = vmatpush1.msra.mxu0 %v1342
        %1786 = vmatprep.subr.mxu0 0.0
        %1787 = vmatpush1.msra.mxu0 %v1343
        %1788 = vmatprep.subr.mxu0 0.0
        %1789 = vmatpush1.msra.mxu0 %v1344
        %1790 = vmatprep.subr.mxu0 0.0
        %1791 = vmatpush1.msra.mxu0 %v1345
        %1792 = vmatprep.subr.mxu0 0.0
        %1793 = vmatpush1.msra.mxu0 %v1346
        %1794 = vmatprep.subr.mxu0 0.0
        %1795 = vmatpush1.msra.mxu0 %v1347
        %1796 = vmatprep.subr.mxu0 0.0
        %1797 = vmatpush1.msra.mxu0 %v1348
        %1798 = vmatprep.subr.mxu0 0.0
        %1799 = vmatpush1.msra.mxu0 %v1349
        %1800 = vmatprep.subr.mxu0 0.0
        %1801 = vmatpush1.msra.mxu0 %v1350
        %1802 = vmatprep.subr.mxu0 0.0
        %1803 = vmatpush1.msra.mxu0 %v1351
        %1804 = vmatprep.subr.mxu0 0.0
        %1805 = vmatpush1.msra.mxu0 0.0
        %1806 = vmatprep.subr.mxu0 0.0
        %1807 = vmatpush1.msra.mxu0 0.0
        %1808 = vmatprep.subr.mxu0 0.0
        %1809 = vmatpush1.msra.mxu0 0.0
        %1810 = vmatprep.subr.mxu0 0.0
        %1811 = vmatpush1.msra.mxu0 0.0
        %1812 = vmatprep.subr.mxu0 0.0
        %1813 = vmatpush1.msra.mxu0 0.0
        %1814 = vmatprep.subr.mxu0 0.0
        %1815 = vmatpush1.msra.mxu0 0.0
        %1816 = vmatprep.subr.mxu0 0.0
        %1817 = vmatpush1.msra.mxu0 0.0
        %1818 = vmatprep.subr.mxu0 0.0
        %1819 = vmatpush1.msra.mxu0 0.0
        %1820 = vmatprep.subr.mxu0 0.0
        %1821 = vmatpush1.msra.mxu0 0.0
        %1822 = vmatprep.subr.mxu0 0.0
        %1823 = vmatpush1.msra.mxu0 0.0
        %1824 = vmatprep.subr.mxu0 0.0
        %1825 = vmatpush1.msra.mxu0 0.0
        %1826 = vmatprep.subr.mxu0 0.0
        %1827 = vmatpush1.msra.mxu0 0.0
        %1828 = vmatprep.subr.mxu0 0.0
        %1829 = vmatpush1.msra.mxu0 0.0
        %1830 = vmatprep.subr.mxu0 0.0
        %1831 = vmatpush1.msra.mxu0 0.0
        %1832 = vmatprep.subr.mxu0 0.0
        %1833 = vmatpush1.msra.mxu0 0.0
        %1834 = vmatprep.subr.mxu0 0.0
        %1835 = vmatpush1.msra.mxu0 0.0
        %1836 = vmatprep.mubr.f32.mxu0 0.0
        %1837 = vmatmul.mubr.f32.gmra.mrb[0].mxu0 %v1144
        %v1838 = vpop.f32.mrb[0].mxu0
        %v1839 = vadd.f32 %v1734, %v1838
        %v1840 = vpop.f32.mrb[0].mxu0
        %1841 = vmatprep.mubr.f32.mxu0 0.0
        %1842 = vmatmul.mubr.f32.gmra.mrb[0].mxu0 %v1153
        %v1843 = vpop.f32.mrb[0].mxu0
        %v1844 = vadd.f32 %v1739, %v1843
        %v1845 = vpop.f32.mrb[0].mxu0
        %1846 = vmatprep.mubr.f32.mxu0 0.0
        %1847 = vmatmul.mubr.f32.gmra.mrb[0].mxu0 %v1162
        %v1848 = vpop.f32.mrb[0].mxu0
        %v1849 = vadd.f32 %v1744, %v1848
        %v1850 = vpop.f32.mrb[0].mxu0
        %1851 = vmatprep.mubr.f32.mxu0 0.0
        %1852 = vmatmul.mubr.f32.gmra.mrb[0].mxu0 %v1171
        %v1853 = vpop.f32.mrb[0].mxu0
        %v1854 = vadd.f32 %v1749, %v1853
        %v1855 = vpop.f32.mrb[0].mxu0
        %1856 = vmatprep.mubr.f32.mxu0 0.0
        %1857 = vmatmul.mubr.f32.gmra.mrb[0].mxu0 %v1180
        %v1858 = vpop.f32.mrb[0].mxu0
        %v1859 = vadd.f32 %v1754, %v1858
        %v1860 = vpop.f32.mrb[0].mxu0
        %1861 = vmatprep.mubr.f32.mxu0 0.0
        %1862 = vmatmul.mubr.f32.gmra.mrb[0].mxu0 %v1189
        %v1863 = vpop.f32.mrb[0].mxu0
        %v1864 = vadd.f32 %v1759, %v1863
        %v1865 = vpop.f32.mrb[0].mxu0
        %1866 = vmatprep.mubr.f32.mxu0 0.0
        %1867 = vmatmul.mubr.f32.gmra.mrb[0].mxu0 %v1198
        %v1868 = vpop.f32.mrb[0].mxu0
        %v1869 = vadd.f32 %v1764, %v1868
        %v1870 = vpop.f32.mrb[0].mxu0
        %1871 = vmatprep.mubr.f32.mxu0 0.0
        %1872 = vmatmul.mubr.f32.gmra.mrb[0].mxu0 %v1207
        %v1873 = vpop.f32.mrb[0].mxu0
        %v1874 = vadd.f32 %v1769, %v1873
        %v1875 = vpop.f32.mrb[0].mxu0
        %1876 = vdwg.mxu0
        %v1877 = vld [vmem:[%s5] sm:$0x1]
        %v1879 = vlaneseq
        %v1880 = vshrl.u32 %v1879, 7
        %v1881 = vsub.s32 0, %v1880
        %v1882 = vrot.slane %v1877, %v1881
        %v1884 = vmul.f32 %v1839, %v1882
        %v1885 = vmul.f32 %v1844, %v1882
        %v1886 = vmul.f32 %v1849, %v1882
        %v1887 = vmul.f32 %v1854, %v1882
        %v1888 = vmul.f32 %v1859, %v1882
        %v1889 = vmul.f32 %v1864, %v1882
        %v1890 = vmul.f32 %v1869, %v1882
        %v1891 = vmul.f32 %v1874, %v1882
        %v1892 = vld [vmem:[%s6] sm:$0x1]
        %v1894 = vlaneseq
        %v1895 = vshrl.u32 %v1894, 7
        %v1896 = vsub.s32 0, %v1895
        %v1897 = vrot.slane %v1892, %v1896
        %v1899 = vadd.f32 %v1884, %v1897
        %v1900 = vadd.f32 %v1885, %v1897
        %v1901 = vadd.f32 %v1886, %v1897
        %v1902 = vadd.f32 %v1887, %v1897
        %v1903 = vadd.f32 %v1888, %v1897
        %v1904 = vadd.f32 %v1889, %v1897
        %v1905 = vadd.f32 %v1890, %v1897
        %v1906 = vadd.f32 %v1891, %v1897
        %v1907 = vadd.f32 %v1899, %v983
        %v1908 = vadd.f32 %v1900, %v984
        %v1909 = vadd.f32 %v1901, %v985
        %v1910 = vadd.f32 %v1902, %v986
        %v1911 = vadd.f32 %v1903, %v987
        %v1912 = vadd.f32 %v1904, %v988
        %v1913 = vadd.f32 %v1905, %v989
        %v1914 = vadd.f32 %v1906, %v990
        %v1915 = vmax.f32 %v1907, 0.0
        %v1916 = vmax.f32 %v1908, 0.0
        %v1917 = vmax.f32 %v1909, 0.0
        %v1918 = vmax.f32 %v1910, 0.0
        %v1919 = vmax.f32 %v1911, 0.0
        %v1920 = vmax.f32 %v1912, 0.0
        %v1921 = vmax.f32 %v1913, 0.0
        %v1922 = vmax.f32 %v1914, 0.0
        %1923 = vst [vmem:[%s382] sm:$0xff] %v1915
        %1924 = vst [vmem:[%s382 + $0x8] sm:$0xff] %v1916
        %1925 = vst [vmem:[%s382 + $0x10] sm:$0xff] %v1917
        %1926 = vst [vmem:[%s382 + $0x18] sm:$0xff] %v1918
        %1927 = vst [vmem:[%s382 + $0x20] sm:$0xff] %v1919
        %1928 = vst [vmem:[%s382 + $0x28] sm:$0xff] %v1920
        %1929 = vst [vmem:[%s382 + $0x30] sm:$0xff] %v1921
        %1930 = vst [vmem:[%s382 + $0x38] sm:$0xff] %v1922
        %s1931 = sand.u32 %s249, 1
        %s1932 = scalar_lea.sflag [#allocation7], %s1931
        %s1933 = sand.u32 %s249, 1
        %s1934 = smul.addr %s1933, 64
        %s1935 = scalar_lea.vmem [#allocation10], %s1934
        // Predicated region
        $region69: #{tpu_custom_call.1} parent=59 // pred_check
          %p1936 = pneg %p259
        $region70: #{tpu_custom_call.1} parent=59 // pred_check_branch
          %1938 = sbr.rel (%p1936) target = $region72
        $region71: #{tpu_custom_call.1} parent=59 // pred_region
          %s1939 = smul.u32 8, %s26
          %s1941 = ssub.s32 1024, 1024
          %1942 = vsyncadd %s1932, %s1941
          %s1943 = smul.addr %s1939, 128
          %s1944 = scalar_lea.hbm %s10, %s1943
          %s1945 = sshll.u32 %s1935, 4
          %s1946 = int_to_ptr.vmem [resolvable:$true] %s1945
          %1951 = dma.vmem_to_hbm [thread:$0]  %s1946, 1024, %s1944, %s1932, 128, 128, 8
        $region72: #{tpu_custom_call.1} parent=59 // pred_fallthru
          _
      $region60: #{tpu_custom_call.1} parent=5 // pred_fallthru
        _
      %p1952 = scmp.le.s32.totalorder 2, %s21
      // Predicated region
      $region73: #{tpu_custom_call.1} parent=5 // pred_check
        %p1953 = pneg %p1952
      $region74: #{tpu_custom_call.1} parent=5 // pred_check_branch
        %1955 = sbr.rel (%p1953) target = $region76
      $region75: #{tpu_custom_call.1} parent=5 // pred_region
        %s1956 = ssub.s32 %s21, 2
        // Predicated region
        $region77: #{tpu_custom_call.1} parent=75 // pred_check
          %p1957 = pneg %p265
        $region78: #{tpu_custom_call.1} parent=75 // pred_check_branch
          %1959 = sbr.rel (%p1957) target = $region80
        $region79: #{tpu_custom_call.1} parent=75 // pred_region
          %s1960 = sand.u32 %s250, 1
          %s1961 = scalar_lea.sflag [#allocation7], %s1960
          %s1962 = sand.u32 %s250, 1
          %s1963 = smul.addr %s1962, 64
          %s1964 = scalar_lea.vmem [#allocation10], %s1963
          %1965 = dma.done %s1961, 1024
        $region80: #{tpu_custom_call.1} parent=75 // pred_fallthru
          _
      $region76: #{tpu_custom_call.1} parent=5 // pred_fallthru
        _
    $region6: #{tpu_custom_call.1} parent=1 // loop_footer
      %s25 = sadd.s32 1, %s21
    $region7: #{tpu_custom_call.1} parent=1 // loop_footer_branch
      %20 = sbr.rel target = $region3
    $region8: #{tpu_custom_call.1} parent=1 // loop_exit
      _
    %1966 = vsyncpa [#allocation6], 1
    %s1967 = scalar_lea.sflag [#allocation6], 1
    %1968 = vsyncpa %s1967, 1
    %1969 = vsyncpa [#allocation9], 1
    %1970 = vsyncpa [#allocation7], 1
    %s1971 = scalar_lea.sflag [#allocation7], 1
    %1972 = vsyncpa %s1971, 1

</llo_original>
